<compile_context>
chip_gen: v5e
topology: v5e:2x2
jax: 0.10.0
libtpu: 0.0.40
codegen_flags: <defaults>
</compile_context>

<pallas_src>
import jax
import jax.numpy as jnp
from jax.experimental import pallas as pl
from jax.experimental.pallas import tpu as pltpu

LEAKY_SLOPE = 0.01     # torch.nn.LeakyReLU default
SN_EPS = 1e-5          # SwitchNorm1d default eps
DROP_P = 0.5           # F.dropout default

F_IN = 3200            # fc1 input features (25 * 128, already lane-aligned)
F_REAL = 100           # true hidden width
F_PAD = 128            # lane-padded hidden width


def _leaky_relu(y):
    return jnp.where(y >= 0, y, LEAKY_SLOPE * y)


def _switch_norm_1d(y, feat_mask, gamma, beta, mw_ln, mw_bn, vw_ln, vw_bn):
    """SwitchNorm1d (training mode) on a lane-padded (B, F_PAD) tensor.

    Padded lanes of `y` are exactly 0 and gamma/beta are 0 there, so the padded
    lanes stay 0 on output. Reductions use the true feature count F_REAL and the
    lane mask so the statistics match the unpadded computation exactly.
    Variances are unbiased (torch .var default).
    """
    b = y.shape[0]
    n = F_REAL
    # layer-norm branch (per-row stats over the real features)
    mean_ln = jnp.sum(y, axis=1, keepdims=True) * (1.0 / n)
    d_ln = (y - mean_ln) * feat_mask
    var_ln = jnp.sum(d_ln * d_ln, axis=1, keepdims=True) * (1.0 / (n - 1))
    # batch-norm branch (per-column stats over the full resident batch)
    mean_bn = jnp.sum(y, axis=0, keepdims=True) * (1.0 / b)
    d_bn = y - mean_bn
    var_bn = jnp.sum(d_bn * d_bn, axis=0, keepdims=True) * (1.0 / (b - 1))
    # softmax-weighted mix (weights precomputed in the wrapper)
    mean = mw_ln * mean_ln + mw_bn * mean_bn
    var = vw_ln * var_ln + vw_bn * var_bn
    inv = jax.lax.rsqrt(var + SN_EPS)          # EUP rsqrt instead of sqrt+divide
    return (y - mean) * (inv * gamma) + beta


def classifier_kernel(
    sw_ref,                                            # SMEM (8,) softmaxed SN mix weights
    x_ref, w1_ref, b1_ref, g1_ref, be1_ref, m1_ref,    # VMEM
    w2_ref, b2_ref, g2_ref, be2_ref, m2_ref,
    w3_ref, b3_ref,
    out_ref,
):
    lane = jax.lax.broadcasted_iota(jnp.int32, (1, F_PAD), 1)
    feat_mask = (lane < F_REAL).astype(jnp.float32)

    # --- fc1 Dense_Block: Linear -> LeakyReLU -> SwitchNorm1d ---
    h = jnp.dot(x_ref[...], w1_ref[...], preferred_element_type=jnp.float32)
    h = _leaky_relu(h + b1_ref[...])
    h = _switch_norm_1d(h, feat_mask, g1_ref[...], be1_ref[...],
                        sw_ref[0], sw_ref[1], sw_ref[2], sw_ref[3])

    # --- dropout #1 (mask precomputed, already scaled by 1/(1-p)) ---
    h = h * m1_ref[...]

    # --- fc2 Dense_Block ---
    h = jnp.dot(h.astype(w2_ref.dtype), w2_ref[...],
                preferred_element_type=jnp.float32)
    h = _leaky_relu(h + b2_ref[...])
    h = _switch_norm_1d(h, feat_mask, g2_ref[...], be2_ref[...],
                        sw_ref[4], sw_ref[5], sw_ref[6], sw_ref[7])

    # --- dropout #2 ---
    h = h * m2_ref[...]

    # GradReverse.grad_reverse is identity in the forward pass (gradient-only op).

    # --- fc3 (lane-padded logits; wrapper slices to num_domains) ---
    out_ref[...] = (
        jnp.dot(h.astype(w3_ref.dtype), w3_ref[...],
                preferred_element_type=jnp.float32) + b3_ref[...]
    )


def init_params(key, num_domains):
    """Deterministic, PyTorch-style Linear init; SwitchNorm weight=1, bias=0."""
    def linear_init(k, fan_in, fan_out):
        kw, kb = jax.random.split(k)
        bound = 1.0 / jnp.sqrt(jnp.float32(fan_in))
        # stored already transposed to (in, out) for the kernel layout
        w = jax.random.uniform(kw, (fan_in, fan_out), jnp.float32, -bound, bound)
        b = jax.random.uniform(kb, (fan_out,), jnp.float32, -bound, bound)
        return w, b

    k1, k2, k3 = jax.random.split(key, 3)
    w1, b1 = linear_init(k1, F_IN, F_REAL)
    w2, b2 = linear_init(k2, F_REAL, F_REAL)
    w3, b3 = linear_init(k3, F_REAL, num_domains)

    def sn_params(f):
        return dict(
            weight=jnp.ones((1, f), jnp.float32),
            bias=jnp.zeros((1, f), jnp.float32),
            mean_weight=jnp.ones((2,), jnp.float32),
            var_weight=jnp.ones((2,), jnp.float32),
        )

    return dict(
        w1=w1, b1=b1, sn1=sn_params(F_REAL),
        w2=w2, b2=b2, sn2=sn_params(F_REAL),
        w3=w3, b3=b3,
    )


def _pad2(a, rows, cols):
    return jnp.pad(a, ((0, rows - a.shape[0]), (0, cols - a.shape[1])))


def pack_params(params):
    """Lane-pad everything to 128 and cast matmul weights to bf16."""
    w1 = _pad2(params["w1"], F_IN, F_PAD).astype(jnp.bfloat16)
    w2 = _pad2(params["w2"], F_PAD, F_PAD).astype(jnp.bfloat16)
    w3 = _pad2(params["w3"], F_PAD, F_PAD).astype(jnp.bfloat16)
    b1 = _pad2(params["b1"].reshape(1, -1), 1, F_PAD)
    b2 = _pad2(params["b2"].reshape(1, -1), 1, F_PAD)
    b3 = _pad2(params["b3"].reshape(1, -1), 1, F_PAD)
    g1 = _pad2(params["sn1"]["weight"], 1, F_PAD)     # padded gamma/beta are 0 so
    be1 = _pad2(params["sn1"]["bias"], 1, F_PAD)      # padded lanes stay exactly 0
    g2 = _pad2(params["sn2"]["weight"], 1, F_PAD)
    be2 = _pad2(params["sn2"]["bias"], 1, F_PAD)
    return dict(w1=w1, b1=b1, g1=g1, be1=be1,
                w2=w2, b2=b2, g2=g2, be2=be2,
                w3=w3, b3=b3)


def svhn_domain_classifier(params, x, dropout_key, constant=1.0, num_domains=2):
    # GradReverse.grad_reverse(x, constant) is identity in the forward pass.
    del constant
    B = x.shape[0]
    pk = pack_params(params)

    # 2-element softmax over the SwitchNorm mixing weights, packed into one SMEM vec.
    sw = jnp.concatenate([
        jax.nn.softmax(params["sn1"]["mean_weight"]),
        jax.nn.softmax(params["sn1"]["var_weight"]),
        jax.nn.softmax(params["sn2"]["mean_weight"]),
        jax.nn.softmax(params["sn2"]["var_weight"]),
    ]).astype(jnp.float32)

    # Dropout masks (p=0.5, training=True as in F.dropout defaults), lane-padded,
    # with the 1/(1-p) scale folded in so the kernel does a single multiply.
    k1, k2 = jax.random.split(dropout_key)
    scale = 1.0 / (1.0 - DROP_P)
    m1 = jnp.where(jax.random.bernoulli(k1, 1.0 - DROP_P, (B, F_PAD)),
                   scale, 0.0).astype(jnp.float32)
    m2 = jnp.where(jax.random.bernoulli(k2, 1.0 - DROP_P, (B, F_PAD)),
                   scale, 0.0).astype(jnp.float32)

    smem = pl.BlockSpec(memory_space=pltpu.MemorySpace.SMEM)
    vmem = pl.BlockSpec(memory_space=pltpu.MemorySpace.VMEM)

    out_padded = pl.pallas_call(
        classifier_kernel,
        out_shape=jax.ShapeDtypeStruct((B, F_PAD), jnp.float32),
        in_specs=[smem] + [vmem] * 13,
        out_specs=vmem,
        compiler_params=pltpu.CompilerParams(vmem_limit_bytes=32 << 20),
    )(
        sw,
        x.astype(jnp.bfloat16),
        pk["w1"], pk["b1"], pk["g1"], pk["be1"], m1,
        pk["w2"], pk["b2"], pk["g2"], pk["be2"], m2,
        pk["w3"], pk["b3"],
    )
    return out_padded[:, :num_domains]


if __name__ == "__main__":
    num_domains = 2
    batch = 8   # must be >= 2: SwitchNorm1d batch variance divides by (B - 1)

    key = jax.random.PRNGKey(0)
    k_param, k_x, k_drop = jax.random.split(key, 3)
    params = init_params(k_param, num_domains)
    x = jax.random.normal(k_x, (batch, F_IN), dtype=jnp.float32)

    out = svhn_domain_classifier(params, x, k_drop, constant=1.0,
                                 num_domains=num_domains)
    out = jax.block_until_ready(out)
    assert out.shape == (batch, num_domains)
    assert jnp.all(jnp.isfinite(out))
    print("KERNEL_OK")
</pallas_src>

<mosaic_0001>
module attributes {stable_mosaic.version = 11 : i64} {
  func.func @classifier_kernel(%arg0: memref<8xf32, #tpu.memory_space<smem>>, %arg1: memref<8x3200xbf16, #tpu.memory_space<vmem>>, %arg2: memref<3200x128xbf16, #tpu.memory_space<vmem>>, %arg3: memref<1x128xf32, #tpu.memory_space<vmem>>, %arg4: memref<1x128xf32, #tpu.memory_space<vmem>>, %arg5: memref<1x128xf32, #tpu.memory_space<vmem>>, %arg6: memref<8x128xf32, #tpu.memory_space<vmem>>, %arg7: memref<128x128xbf16, #tpu.memory_space<vmem>>, %arg8: memref<1x128xf32, #tpu.memory_space<vmem>>, %arg9: memref<1x128xf32, #tpu.memory_space<vmem>>, %arg10: memref<1x128xf32, #tpu.memory_space<vmem>>, %arg11: memref<8x128xf32, #tpu.memory_space<vmem>>, %arg12: memref<128x128xbf16, #tpu.memory_space<vmem>>, %arg13: memref<1x128xf32, #tpu.memory_space<vmem>>, %arg14: memref<8x128xf32, #tpu.memory_space<vmem>>) attributes {dimension_semantics = [], scalar_prefetch = 0 : i64, scratch_operands = 0 : i64, tpu.core_type = #tpu.core_type<tc>} {
    %0 = tpu.iota {dimensions = array<i32: 1>} : vector<1x128xi32>
    %c100_i32 = arith.constant 100 : i32
    %1 = vector.broadcast %c100_i32 : i32 to vector<1x128xi32>
    %2 = arith.cmpi slt, %0, %1 : vector<1x128xi32>
    %3 = arith.extui %2 : vector<1x128xi1> to vector<1x128xi32>
    %4 = arith.sitofp %3 : vector<1x128xi32> to vector<1x128xf32>
    %c0 = arith.constant 0 : index
    %c0_0 = arith.constant 0 : index
    %5 = vector.load %arg1[%c0, %c0_0] : memref<8x3200xbf16, #tpu.memory_space<vmem>>, vector<8x3200xbf16>
    %c0_1 = arith.constant 0 : index
    %c0_2 = arith.constant 0 : index
    %6 = vector.load %arg2[%c0_1, %c0_2] : memref<3200x128xbf16, #tpu.memory_space<vmem>>, vector<3200x128xbf16>
    %cst = arith.constant dense<0.000000e+00> : vector<8x128xf32>
    %7 = tpu.matmul %5, %6, %cst {dimension_numbers = #tpu.dot_dimension_numbers<[1], [0], [0], [1], [0, 0, 1, 1], [], []>} : vector<8x3200xbf16>, vector<3200x128xbf16>, vector<8x128xf32> -> vector<8x128xf32>
    %c0_3 = arith.constant 0 : index
    %c0_4 = arith.constant 0 : index
    %8 = vector.load %arg3[%c0_3, %c0_4] : memref<1x128xf32, #tpu.memory_space<vmem>>, vector<1x128xf32>
    %9 = vector.broadcast %8 : vector<1x128xf32> to vector<8x128xf32>
    %10 = arith.addf %7, %9 : vector<8x128xf32>
    %cst_5 = arith.constant 0.000000e+00 : f32
    %11 = vector.broadcast %cst_5 : f32 to vector<8x128xf32>
    %12 = arith.cmpf oge, %10, %11 : vector<8x128xf32>
    %cst_6 = arith.constant 0.00999999977 : f32
    %13 = vector.broadcast %cst_6 : f32 to vector<8x128xf32>
    %14 = arith.mulf %13, %10 : vector<8x128xf32>
    %15 = arith.select %12, %10, %14 : vector<8x128xi1>, vector<8x128xf32>
    %c0_7 = arith.constant 0 : index
    %c0_8 = arith.constant 0 : index
    %16 = vector.load %arg4[%c0_7, %c0_8] : memref<1x128xf32, #tpu.memory_space<vmem>>, vector<1x128xf32>
    %c0_9 = arith.constant 0 : index
    %c0_10 = arith.constant 0 : index
    %17 = vector.load %arg5[%c0_9, %c0_10] : memref<1x128xf32, #tpu.memory_space<vmem>>, vector<1x128xf32>
    %c0_11 = arith.constant 0 : index
    %18 = memref.load %arg0[%c0_11] : memref<8xf32, #tpu.memory_space<smem>>
    %c1 = arith.constant 1 : index
    %19 = memref.load %arg0[%c1] : memref<8xf32, #tpu.memory_space<smem>>
    %c2 = arith.constant 2 : index
    %20 = memref.load %arg0[%c2] : memref<8xf32, #tpu.memory_space<smem>>
    %c3 = arith.constant 3 : index
    %21 = memref.load %arg0[%c3] : memref<8xf32, #tpu.memory_space<smem>>
    %cst_12 = arith.constant dense<0.000000e+00> : vector<8xf32>
    %22 = vector.multi_reduction <add>, %15, %cst_12 [1] : vector<8x128xf32> to vector<8xf32>
    %23 = vector.shape_cast %22 : vector<8xf32> to vector<8x1xf32>
    %cst_13 = arith.constant 0.00999999977 : f32
    %24 = vector.broadcast %cst_13 : f32 to vector<8x1xf32>
    %25 = arith.mulf %23, %24 : vector<8x1xf32>
    %26 = vector.broadcast %25 : vector<8x1xf32> to vector<8x128xf32>
    %27 = arith.subf %15, %26 : vector<8x128xf32>
    %28 = vector.broadcast %4 : vector<1x128xf32> to vector<8x128xf32>
    %29 = arith.mulf %27, %28 : vector<8x128xf32>
    %30 = arith.mulf %29, %29 : vector<8x128xf32>
    %cst_14 = arith.constant dense<0.000000e+00> : vector<8xf32>
    %31 = vector.multi_reduction <add>, %30, %cst_14 [1] : vector<8x128xf32> to vector<8xf32>
    %32 = vector.shape_cast %31 : vector<8xf32> to vector<8x1xf32>
    %cst_15 = arith.constant 0.0101010101 : f32
    %33 = vector.broadcast %cst_15 : f32 to vector<8x1xf32>
    %34 = arith.mulf %32, %33 : vector<8x1xf32>
    %cst_16 = arith.constant dense<0.000000e+00> : vector<128xf32>
    %35 = vector.multi_reduction <add>, %15, %cst_16 [0] : vector<8x128xf32> to vector<128xf32>
    %36 = vector.shape_cast %35 : vector<128xf32> to vector<1x128xf32>
    %cst_17 = arith.constant 1.250000e-01 : f32
    %37 = vector.broadcast %cst_17 : f32 to vector<1x128xf32>
    %38 = arith.mulf %36, %37 : vector<1x128xf32>
    %39 = vector.broadcast %38 : vector<1x128xf32> to vector<8x128xf32>
    %40 = arith.subf %15, %39 : vector<8x128xf32>
    %41 = arith.mulf %40, %40 : vector<8x128xf32>
    %cst_18 = arith.constant dense<0.000000e+00> : vector<128xf32>
    %42 = vector.multi_reduction <add>, %41, %cst_18 [0] : vector<8x128xf32> to vector<128xf32>
    %43 = vector.shape_cast %42 : vector<128xf32> to vector<1x128xf32>
    %cst_19 = arith.constant 0.142857149 : f32
    %44 = vector.broadcast %cst_19 : f32 to vector<1x128xf32>
    %45 = arith.mulf %43, %44 : vector<1x128xf32>
    %46 = vector.broadcast %18 : f32 to vector<8x1xf32>
    %47 = arith.mulf %46, %25 : vector<8x1xf32>
    %48 = vector.broadcast %19 : f32 to vector<1x128xf32>
    %49 = arith.mulf %48, %38 : vector<1x128xf32>
    %50 = vector.broadcast %47 : vector<8x1xf32> to vector<8x128xf32>
    %51 = vector.broadcast %49 : vector<1x128xf32> to vector<8x128xf32>
    %52 = arith.addf %50, %51 : vector<8x128xf32>
    %53 = vector.broadcast %20 : f32 to vector<8x1xf32>
    %54 = arith.mulf %53, %34 : vector<8x1xf32>
    %55 = vector.broadcast %21 : f32 to vector<1x128xf32>
    %56 = arith.mulf %55, %45 : vector<1x128xf32>
    %57 = vector.broadcast %54 : vector<8x1xf32> to vector<8x128xf32>
    %58 = vector.broadcast %56 : vector<1x128xf32> to vector<8x128xf32>
    %59 = arith.addf %57, %58 : vector<8x128xf32>
    %cst_20 = arith.constant 9.99999974E-6 : f32
    %60 = vector.broadcast %cst_20 : f32 to vector<8x128xf32>
    %61 = arith.addf %59, %60 : vector<8x128xf32>
    %62 = math.rsqrt %61 : vector<8x128xf32>
    %63 = arith.subf %15, %52 : vector<8x128xf32>
    %64 = vector.broadcast %16 : vector<1x128xf32> to vector<8x128xf32>
    %65 = arith.mulf %62, %64 : vector<8x128xf32>
    %66 = arith.mulf %63, %65 : vector<8x128xf32>
    %67 = vector.broadcast %17 : vector<1x128xf32> to vector<8x128xf32>
    %68 = arith.addf %66, %67 : vector<8x128xf32>
    %c0_21 = arith.constant 0 : index
    %c0_22 = arith.constant 0 : index
    %69 = vector.load %arg6[%c0_21, %c0_22] : memref<8x128xf32, #tpu.memory_space<vmem>>, vector<8x128xf32>
    %70 = arith.mulf %68, %69 : vector<8x128xf32>
    %71 = arith.truncf %70 : vector<8x128xf32> to vector<8x128xbf16>
    %c0_23 = arith.constant 0 : index
    %c0_24 = arith.constant 0 : index
    %72 = vector.load %arg7[%c0_23, %c0_24] : memref<128x128xbf16, #tpu.memory_space<vmem>>, vector<128x128xbf16>
    %cst_25 = arith.constant dense<0.000000e+00> : vector<8x128xf32>
    %73 = tpu.matmul %71, %72, %cst_25 {dimension_numbers = #tpu.dot_dimension_numbers<[1], [0], [0], [1], [0, 0, 1, 1], [], []>} : vector<8x128xbf16>, vector<128x128xbf16>, vector<8x128xf32> -> vector<8x128xf32>
    %c0_26 = arith.constant 0 : index
    %c0_27 = arith.constant 0 : index
    %74 = vector.load %arg8[%c0_26, %c0_27] : memref<1x128xf32, #tpu.memory_space<vmem>>, vector<1x128xf32>
    %75 = vector.broadcast %74 : vector<1x128xf32> to vector<8x128xf32>
    %76 = arith.addf %73, %75 : vector<8x128xf32>
    %cst_28 = arith.constant 0.000000e+00 : f32
    %77 = vector.broadcast %cst_28 : f32 to vector<8x128xf32>
    %78 = arith.cmpf oge, %76, %77 : vector<8x128xf32>
    %cst_29 = arith.constant 0.00999999977 : f32
    %79 = vector.broadcast %cst_29 : f32 to vector<8x128xf32>
    %80 = arith.mulf %79, %76 : vector<8x128xf32>
    %81 = arith.select %78, %76, %80 : vector<8x128xi1>, vector<8x128xf32>
    %c0_30 = arith.constant 0 : index
    %c0_31 = arith.constant 0 : index
    %82 = vector.load %arg9[%c0_30, %c0_31] : memref<1x128xf32, #tpu.memory_space<vmem>>, vector<1x128xf32>
    %c0_32 = arith.constant 0 : index
    %c0_33 = arith.constant 0 : index
    %83 = vector.load %arg10[%c0_32, %c0_33] : memref<1x128xf32, #tpu.memory_space<vmem>>, vector<1x128xf32>
    %c4 = arith.constant 4 : index
    %84 = memref.load %arg0[%c4] : memref<8xf32, #tpu.memory_space<smem>>
    %c5 = arith.constant 5 : index
    %85 = memref.load %arg0[%c5] : memref<8xf32, #tpu.memory_space<smem>>
    %c6 = arith.constant 6 : index
    %86 = memref.load %arg0[%c6] : memref<8xf32, #tpu.memory_space<smem>>
    %c7 = arith.constant 7 : index
    %87 = memref.load %arg0[%c7] : memref<8xf32, #tpu.memory_space<smem>>
    %cst_34 = arith.constant dense<0.000000e+00> : vector<8xf32>
    %88 = vector.multi_reduction <add>, %81, %cst_34 [1] : vector<8x128xf32> to vector<8xf32>
    %89 = vector.shape_cast %88 : vector<8xf32> to vector<8x1xf32>
    %cst_35 = arith.constant 0.00999999977 : f32
    %90 = vector.broadcast %cst_35 : f32 to vector<8x1xf32>
    %91 = arith.mulf %89, %90 : vector<8x1xf32>
    %92 = vector.broadcast %91 : vector<8x1xf32> to vector<8x128xf32>
    %93 = arith.subf %81, %92 : vector<8x128xf32>
    %94 = vector.broadcast %4 : vector<1x128xf32> to vector<8x128xf32>
    %95 = arith.mulf %93, %94 : vector<8x128xf32>
    %96 = arith.mulf %95, %95 : vector<8x128xf32>
    %cst_36 = arith.constant dense<0.000000e+00> : vector<8xf32>
    %97 = vector.multi_reduction <add>, %96, %cst_36 [1] : vector<8x128xf32> to vector<8xf32>
    %98 = vector.shape_cast %97 : vector<8xf32> to vector<8x1xf32>
    %cst_37 = arith.constant 0.0101010101 : f32
    %99 = vector.broadcast %cst_37 : f32 to vector<8x1xf32>
    %100 = arith.mulf %98, %99 : vector<8x1xf32>
    %cst_38 = arith.constant dense<0.000000e+00> : vector<128xf32>
    %101 = vector.multi_reduction <add>, %81, %cst_38 [0] : vector<8x128xf32> to vector<128xf32>
    %102 = vector.shape_cast %101 : vector<128xf32> to vector<1x128xf32>
    %cst_39 = arith.constant 1.250000e-01 : f32
    %103 = vector.broadcast %cst_39 : f32 to vector<1x128xf32>
    %104 = arith.mulf %102, %103 : vector<1x128xf32>
    %105 = vector.broadcast %104 : vector<1x128xf32> to vector<8x128xf32>
    %106 = arith.subf %81, %105 : vector<8x128xf32>
    %107 = arith.mulf %106, %106 : vector<8x128xf32>
    %cst_40 = arith.constant dense<0.000000e+00> : vector<128xf32>
    %108 = vector.multi_reduction <add>, %107, %cst_40 [0] : vector<8x128xf32> to vector<128xf32>
    %109 = vector.shape_cast %108 : vector<128xf32> to vector<1x128xf32>
    %cst_41 = arith.constant 0.142857149 : f32
    %110 = vector.broadcast %cst_41 : f32 to vector<1x128xf32>
    %111 = arith.mulf %109, %110 : vector<1x128xf32>
    %112 = vector.broadcast %84 : f32 to vector<8x1xf32>
    %113 = arith.mulf %112, %91 : vector<8x1xf32>
    %114 = vector.broadcast %85 : f32 to vector<1x128xf32>
    %115 = arith.mulf %114, %104 : vector<1x128xf32>
    %116 = vector.broadcast %113 : vector<8x1xf32> to vector<8x128xf32>
    %117 = vector.broadcast %115 : vector<1x128xf32> to vector<8x128xf32>
    %118 = arith.addf %116, %117 : vector<8x128xf32>
    %119 = vector.broadcast %86 : f32 to vector<8x1xf32>
    %120 = arith.mulf %119, %100 : vector<8x1xf32>
    %121 = vector.broadcast %87 : f32 to vector<1x128xf32>
    %122 = arith.mulf %121, %111 : vector<1x128xf32>
    %123 = vector.broadcast %120 : vector<8x1xf32> to vector<8x128xf32>
    %124 = vector.broadcast %122 : vector<1x128xf32> to vector<8x128xf32>
    %125 = arith.addf %123, %124 : vector<8x128xf32>
    %cst_42 = arith.constant 9.99999974E-6 : f32
    %126 = vector.broadcast %cst_42 : f32 to vector<8x128xf32>
    %127 = arith.addf %125, %126 : vector<8x128xf32>
    %128 = math.rsqrt %127 : vector<8x128xf32>
    %129 = arith.subf %81, %118 : vector<8x128xf32>
    %130 = vector.broadcast %82 : vector<1x128xf32> to vector<8x128xf32>
    %131 = arith.mulf %128, %130 : vector<8x128xf32>
    %132 = arith.mulf %129, %131 : vector<8x128xf32>
    %133 = vector.broadcast %83 : vector<1x128xf32> to vector<8x128xf32>
    %134 = arith.addf %132, %133 : vector<8x128xf32>
    %c0_43 = arith.constant 0 : index
    %c0_44 = arith.constant 0 : index
    %135 = vector.load %arg11[%c0_43, %c0_44] : memref<8x128xf32, #tpu.memory_space<vmem>>, vector<8x128xf32>
    %136 = arith.mulf %134, %135 : vector<8x128xf32>
    %137 = arith.truncf %136 : vector<8x128xf32> to vector<8x128xbf16>
    %c0_45 = arith.constant 0 : index
    %c0_46 = arith.constant 0 : index
    %138 = vector.load %arg12[%c0_45, %c0_46] : memref<128x128xbf16, #tpu.memory_space<vmem>>, vector<128x128xbf16>
    %cst_47 = arith.constant dense<0.000000e+00> : vector<8x128xf32>
    %139 = tpu.matmul %137, %138, %cst_47 {dimension_numbers = #tpu.dot_dimension_numbers<[1], [0], [0], [1], [0, 0, 1, 1], [], []>} : vector<8x128xbf16>, vector<128x128xbf16>, vector<8x128xf32> -> vector<8x128xf32>
    %c0_48 = arith.constant 0 : index
    %c0_49 = arith.constant 0 : index
    %140 = vector.load %arg13[%c0_48, %c0_49] : memref<1x128xf32, #tpu.memory_space<vmem>>, vector<1x128xf32>
    %141 = vector.broadcast %140 : vector<1x128xf32> to vector<8x128xf32>
    %142 = arith.addf %139, %141 : vector<8x128xf32>
    %c0_50 = arith.constant 0 : index
    %c0_51 = arith.constant 0 : index
    %143 = vector.load %arg14[%c0_50, %c0_51] : memref<8x128xf32, #tpu.memory_space<vmem>>, vector<8x128xf32>
    tpu.vector_store %arg14[%c0_50, %c0_51], %142 {strides = array<i32>} : memref<8x128xf32, #tpu.memory_space<vmem>>, vector<8x128xf32>,
    return
  }
}

</mosaic_0001>

<llo_original>
// kernel: tpu_custom_call.1
$region0: #{tpu_custom_call.1}
  #allocation0 [shape = 'u32[]', space=smem, size = 0x4, offset = 0x4, fixed_abs, tag = 'smem constant byte address 0x4 - core index']
  #allocation1 [shape = 'u32[72,128]{1,0:T(1,128)}', space=vmem, size = 0x9000, scoped, tag = 'internal scratch']
  %s0 = inlined_call_operand.hbm [shape: f32[8], index: 0, kind: input, shape index: {}]
  %s1 = inlined_call_operand.hbm [shape: bf16[8,3200], index: 1, kind: input, shape index: {}]
  %s2 = inlined_call_operand.hbm [shape: bf16[3200,128], index: 2, kind: input, shape index: {}]
  %s3 = inlined_call_operand.vmem [shape: f32[1,128], index: 3, kind: input, shape index: {}]
  %s4 = inlined_call_operand.vmem [shape: f32[1,128], index: 4, kind: input, shape index: {}]
  %s5 = inlined_call_operand.hbm [shape: f32[1,128], index: 5, kind: input, shape index: {}]
  %s6 = inlined_call_operand.hbm [shape: f32[8,128], index: 6, kind: input, shape index: {}]
  %s7 = inlined_call_operand.hbm [shape: bf16[128,128], index: 7, kind: input, shape index: {}]
  %s8 = inlined_call_operand.hbm [shape: f32[1,128], index: 8, kind: input, shape index: {}]
  %s9 = inlined_call_operand.hbm [shape: f32[1,128], index: 9, kind: input, shape index: {}]
  %s10 = inlined_call_operand.hbm [shape: f32[1,128], index: 10, kind: input, shape index: {}]
  %s11 = inlined_call_operand.vmem [shape: f32[8,128], index: 11, kind: input, shape index: {}]
  %s12 = inlined_call_operand.hbm [shape: bf16[128,128], index: 12, kind: input, shape index: {}]
  %s13 = inlined_call_operand.vmem [shape: f32[1,128], index: 13, kind: input, shape index: {}]
  %s14 = inlined_call_operand.hbm [shape: f32[8,128], index: 14, kind: output, shape index: {}]
  %s15 = sld [smem:[#allocation0]]
  $region106: #{tpu_custom_call.1} parent=0
    _
  %s17 = ssub.s32 1, %s15
  %s18 = scalar_select 0, %s17, %s15
  $region1: #{tpu_custom_call.1} parent=0
    #allocation2 [shape = 'u8[512]{0}', space=smem, size = 0x200, scoped, tag = 'input window, operand 0, single buffered']
    #allocation3 [shape = 's32[1]{0}', space=sflag, size = 0x4, scoped, tag = 'scoped memory for tpu_custom_call.1']
    #allocation4 [shape = 's32[1]{0}', space=sflag, size = 0x4, scoped, tag = 'scoped memory for tpu_custom_call.1']
    #allocation5 [shape = 's32[1]{0}', space=sflag, size = 0x4, scoped, tag = 'scoped memory for tpu_custom_call.1']
    #allocation6 [shape = 'u8[51200]{0}', space=vmem, size = 0xc800, scoped, tag = 'input window, operand 1, single buffered']
    #allocation7 [shape = 'u8[819200]{0}', space=vmem, size = 0xc8000, scoped, tag = 'input window, operand 2, single buffered']
    #allocation8 [shape = 's32[1]{0}', space=sflag, size = 0x4, scoped, tag = 'scoped memory for tpu_custom_call.1']
    #allocation9 [shape = 'u8[512]{0}', space=vmem, size = 0x400, scoped, tag = 'input window, operand 5, single buffered']
    #allocation10 [shape = 'u8[4096]{0}', space=vmem, size = 0x1000, scoped, tag = 'input window, operand 6, single buffered']
    #allocation11 [shape = 's32[1]{0}', space=sflag, size = 0x4, scoped, tag = 'scoped memory for tpu_custom_call.1']
    #allocation12 [shape = 'u8[32768]{0}', space=vmem, size = 0x8000, scoped, tag = 'input window, operand 7, single buffered']
    #allocation13 [shape = 'u8[512]{0}', space=vmem, size = 0x400, scoped, tag = 'input window, operand 8, single buffered']
    #allocation14 [shape = 's32[1]{0}', space=sflag, size = 0x4, scoped, tag = 'scoped memory for tpu_custom_call.1']
    #allocation15 [shape = 'u8[512]{0}', space=vmem, size = 0x400, scoped, tag = 'input window, operand 9, single buffered']
    #allocation16 [shape = 'u8[512]{0}', space=vmem, size = 0x400, scoped, tag = 'input window, operand 10, single buffered']
    #allocation17 [shape = 's32[1]{0}', space=sflag, size = 0x4, scoped, tag = 'scoped memory for tpu_custom_call.1']
    #allocation18 [shape = 'u8[32768]{0}', space=vmem, size = 0x8000, scoped, tag = 'input window, operand 12, single buffered']
    #allocation19 [shape = 'u8[4096]{0}', space=vmem, size = 0x1000, scoped, tag = 'output window, operand 0, single buffered']
    %19 = vsyncpa [#allocation5], 0
    %20 = vsyncpa [#allocation3], 0
    %21 = vsyncpa [#allocation8], 0
    %22 = vsyncpa [#allocation11], 0
    %23 = vsyncpa [#allocation14], 0
    %24 = vsyncpa [#allocation17], 0
    %25 = vsyncpa [#allocation4], 0
    // Predicated region
    $region2: #{tpu_custom_call.1} parent=1 // pred_check
      _
    $region3: #{tpu_custom_call.1} parent=1 // pred_check_branch
      %27 = sbr.rel (0) target = $region5
    $region4: #{tpu_custom_call.1} parent=1 // pred_region
      %29 = vsyncadd [#allocation5], 0
      %s31 = sshll.u32 %s0, 4
      %s32 = int_to_ptr.hbm [resolvable:$true] %s31
      %34 = dma.hbm_to_smem %s32, 16, [#allocation2], [#allocation5]
    $region5: #{tpu_custom_call.1} parent=1 // pred_fallthru
      _
    // Predicated region
    $region6: #{tpu_custom_call.1} parent=1 // pred_check
      _
    $region7: #{tpu_custom_call.1} parent=1 // pred_check_branch
      %36 = sbr.rel (0) target = $region9
    $region8: #{tpu_custom_call.1} parent=1 // pred_region
      %38 = vsyncadd [#allocation3], 0
      %s40 = sshll.u32 %s1, 4
      %s41 = int_to_ptr.hbm [resolvable:$true] %s40
      %s42 = sshll.u32 [#allocation6], 4
      %s43 = int_to_ptr.vmem [resolvable:$true] %s42
      %45 = dma.hbm_to_vmem [thread:$0]  %s41, 1600, %s43, [#allocation3]
    $region9: #{tpu_custom_call.1} parent=1 // pred_fallthru
      _
    // Predicated region
    $region10: #{tpu_custom_call.1} parent=1 // pred_check
      _
    $region11: #{tpu_custom_call.1} parent=1 // pred_check_branch
      %47 = sbr.rel (0) target = $region13
    $region12: #{tpu_custom_call.1} parent=1 // pred_region
      %49 = vsyncadd [#allocation8], 0
      %s50 = sshll.u32 %s2, 4
      %s51 = int_to_ptr.hbm [resolvable:$true] %s50
      %s52 = sshll.u32 [#allocation7], 4
      %s53 = int_to_ptr.vmem [resolvable:$true] %s52
      %58 = dma.hbm_to_vmem [thread:$0]  %s51, 25600, %s53, [#allocation8], 64, 64, 4
    $region13: #{tpu_custom_call.1} parent=1 // pred_fallthru
      _
    // Predicated region
    $region14: #{tpu_custom_call.1} parent=1 // pred_check
      _
    $region15: #{tpu_custom_call.1} parent=1 // pred_check_branch
      %60 = sbr.rel (0) target = $region17
    $region16: #{tpu_custom_call.1} parent=1 // pred_region
      _
    $region17: #{tpu_custom_call.1} parent=1 // pred_fallthru
      _
    // Predicated region
    $region18: #{tpu_custom_call.1} parent=1 // pred_check
      _
    $region19: #{tpu_custom_call.1} parent=1 // pred_check_branch
      %62 = sbr.rel (0) target = $region21
    $region20: #{tpu_custom_call.1} parent=1 // pred_region
      _
    $region21: #{tpu_custom_call.1} parent=1 // pred_fallthru
      _
    // Predicated region
    $region22: #{tpu_custom_call.1} parent=1 // pred_check
      _
    $region23: #{tpu_custom_call.1} parent=1 // pred_check_branch
      %64 = sbr.rel (0) target = $region25
    $region24: #{tpu_custom_call.1} parent=1 // pred_region
      %66 = vsyncadd [#allocation8], 0
      %s68 = sshll.u32 %s5, 4
      %s69 = int_to_ptr.hbm [resolvable:$true] %s68
      %s70 = sshll.u32 [#allocation9], 4
      %s71 = int_to_ptr.vmem [resolvable:$true] %s70
      %73 = dma.hbm_to_vmem [thread:$0]  %s69, 16, %s71, [#allocation8]
    $region25: #{tpu_custom_call.1} parent=1 // pred_fallthru
      _
    // Predicated region
    $region26: #{tpu_custom_call.1} parent=1 // pred_check
      _
    $region27: #{tpu_custom_call.1} parent=1 // pred_check_branch
      %75 = sbr.rel (0) target = $region29
    $region28: #{tpu_custom_call.1} parent=1 // pred_region
      %77 = vsyncadd [#allocation11], 0
      %s79 = sshll.u32 %s6, 4
      %s80 = int_to_ptr.hbm [resolvable:$true] %s79
      %s81 = sshll.u32 [#allocation10], 4
      %s82 = int_to_ptr.vmem [resolvable:$true] %s81
      %84 = dma.hbm_to_vmem [thread:$0]  %s80, 128, %s82, [#allocation11]
    $region29: #{tpu_custom_call.1} parent=1 // pred_fallthru
      _
    // Predicated region
    $region30: #{tpu_custom_call.1} parent=1 // pred_check
      _
    $region31: #{tpu_custom_call.1} parent=1 // pred_check_branch
      %86 = sbr.rel (0) target = $region33
    $region32: #{tpu_custom_call.1} parent=1 // pred_region
      %88 = vsyncadd [#allocation11], 0
      %s89 = sshll.u32 %s7, 4
      %s90 = int_to_ptr.hbm [resolvable:$true] %s89
      %s91 = sshll.u32 [#allocation12], 4
      %s92 = int_to_ptr.vmem [resolvable:$true] %s91
      %97 = dma.hbm_to_vmem [thread:$0]  %s90, 1024, %s92, [#allocation11], 64, 64, 4
    $region33: #{tpu_custom_call.1} parent=1 // pred_fallthru
      _
    // Predicated region
    $region34: #{tpu_custom_call.1} parent=1 // pred_check
      _
    $region35: #{tpu_custom_call.1} parent=1 // pred_check_branch
      %99 = sbr.rel (0) target = $region37
    $region36: #{tpu_custom_call.1} parent=1 // pred_region
      %101 = vsyncadd [#allocation14], 0
      %s103 = sshll.u32 %s8, 4
      %s104 = int_to_ptr.hbm [resolvable:$true] %s103
      %s105 = sshll.u32 [#allocation13], 4
      %s106 = int_to_ptr.vmem [resolvable:$true] %s105
      %108 = dma.hbm_to_vmem [thread:$0]  %s104, 16, %s106, [#allocation14]
    $region37: #{tpu_custom_call.1} parent=1 // pred_fallthru
      _
    // Predicated region
    $region38: #{tpu_custom_call.1} parent=1 // pred_check
      _
    $region39: #{tpu_custom_call.1} parent=1 // pred_check_branch
      %110 = sbr.rel (0) target = $region41
    $region40: #{tpu_custom_call.1} parent=1 // pred_region
      %112 = vsyncadd [#allocation14], 0
      %s114 = sshll.u32 %s9, 4
      %s115 = int_to_ptr.hbm [resolvable:$true] %s114
      %s116 = sshll.u32 [#allocation15], 4
      %s117 = int_to_ptr.vmem [resolvable:$true] %s116
      %119 = dma.hbm_to_vmem [thread:$0]  %s115, 16, %s117, [#allocation14]
    $region41: #{tpu_custom_call.1} parent=1 // pred_fallthru
      _
    // Predicated region
    $region42: #{tpu_custom_call.1} parent=1 // pred_check
      _
    $region43: #{tpu_custom_call.1} parent=1 // pred_check_branch
      %121 = sbr.rel (0) target = $region45
    $region44: #{tpu_custom_call.1} parent=1 // pred_region
      %123 = vsyncadd [#allocation17], 0
      %s125 = sshll.u32 %s10, 4
      %s126 = int_to_ptr.hbm [resolvable:$true] %s125
      %s127 = sshll.u32 [#allocation16], 4
      %s128 = int_to_ptr.vmem [resolvable:$true] %s127
      %130 = dma.hbm_to_vmem [thread:$0]  %s126, 16, %s128, [#allocation17]
    $region45: #{tpu_custom_call.1} parent=1 // pred_fallthru
      _
    // Predicated region
    $region46: #{tpu_custom_call.1} parent=1 // pred_check
      _
    $region47: #{tpu_custom_call.1} parent=1 // pred_check_branch
      %132 = sbr.rel (0) target = $region49
    $region48: #{tpu_custom_call.1} parent=1 // pred_region
      _
    $region49: #{tpu_custom_call.1} parent=1 // pred_fallthru
      _
    // Predicated region
    $region50: #{tpu_custom_call.1} parent=1 // pred_check
      _
    $region51: #{tpu_custom_call.1} parent=1 // pred_check_branch
      %134 = sbr.rel (0) target = $region53
    $region52: #{tpu_custom_call.1} parent=1 // pred_region
      %136 = vsyncadd [#allocation17], 0
      %s137 = sshll.u32 %s12, 4
      %s138 = int_to_ptr.hbm [resolvable:$true] %s137
      %s139 = sshll.u32 [#allocation18], 4
      %s140 = int_to_ptr.vmem [resolvable:$true] %s139
      %145 = dma.hbm_to_vmem [thread:$0]  %s138, 1024, %s140, [#allocation17], 64, 64, 4
    $region53: #{tpu_custom_call.1} parent=1 // pred_fallthru
      _
    // Predicated region
    $region54: #{tpu_custom_call.1} parent=1 // pred_check
      _
    $region55: #{tpu_custom_call.1} parent=1 // pred_check_branch
      %147 = sbr.rel (0) target = $region57
    $region56: #{tpu_custom_call.1} parent=1 // pred_region
      _
    $region57: #{tpu_custom_call.1} parent=1 // pred_fallthru
      _
    // Predicated region
    $region58: #{tpu_custom_call.1} parent=1 // pred_check
      _
    $region59: #{tpu_custom_call.1} parent=1 // pred_check_branch
      %149 = sbr.rel (0) target = $region61
    $region60: #{tpu_custom_call.1} parent=1 // pred_region
      %151 = dma.done [#allocation5], 16
    $region61: #{tpu_custom_call.1} parent=1 // pred_fallthru
      _
    // Predicated region
    $region62: #{tpu_custom_call.1} parent=1 // pred_check
      _
    $region63: #{tpu_custom_call.1} parent=1 // pred_check_branch
      %153 = sbr.rel (0) target = $region65
    $region64: #{tpu_custom_call.1} parent=1 // pred_region
      %155 = dma.done [#allocation3], 1600
    $region65: #{tpu_custom_call.1} parent=1 // pred_fallthru
      _
    // Predicated region
    $region66: #{tpu_custom_call.1} parent=1 // pred_check
      _
    $region67: #{tpu_custom_call.1} parent=1 // pred_check_branch
      %157 = sbr.rel (0) target = $region69
    $region68: #{tpu_custom_call.1} parent=1 // pred_region
      %159 = dma.done [#allocation8], 25600
    $region69: #{tpu_custom_call.1} parent=1 // pred_fallthru
      _
    // Predicated region
    $region70: #{tpu_custom_call.1} parent=1 // pred_check
      _
    $region71: #{tpu_custom_call.1} parent=1 // pred_check_branch
      %161 = sbr.rel (0) target = $region73
    $region72: #{tpu_custom_call.1} parent=1 // pred_region
      %163 = dma.done [#allocation8], 16
    $region73: #{tpu_custom_call.1} parent=1 // pred_fallthru
      _
    // Predicated region
    $region74: #{tpu_custom_call.1} parent=1 // pred_check
      _
    $region75: #{tpu_custom_call.1} parent=1 // pred_check_branch
      %165 = sbr.rel (0) target = $region77
    $region76: #{tpu_custom_call.1} parent=1 // pred_region
      %167 = dma.done [#allocation11], 128
    $region77: #{tpu_custom_call.1} parent=1 // pred_fallthru
      _
    // Predicated region
    $region78: #{tpu_custom_call.1} parent=1 // pred_check
      _
    $region79: #{tpu_custom_call.1} parent=1 // pred_check_branch
      %169 = sbr.rel (0) target = $region81
    $region80: #{tpu_custom_call.1} parent=1 // pred_region
      %171 = dma.done [#allocation11], 1024
    $region81: #{tpu_custom_call.1} parent=1 // pred_fallthru
      _
    // Predicated region
    $region82: #{tpu_custom_call.1} parent=1 // pred_check
      _
    $region83: #{tpu_custom_call.1} parent=1 // pred_check_branch
      %173 = sbr.rel (0) target = $region85
    $region84: #{tpu_custom_call.1} parent=1 // pred_region
      %175 = dma.done [#allocation14], 16
    $region85: #{tpu_custom_call.1} parent=1 // pred_fallthru
      _
    // Predicated region
    $region86: #{tpu_custom_call.1} parent=1 // pred_check
      _
    $region87: #{tpu_custom_call.1} parent=1 // pred_check_branch
      %177 = sbr.rel (0) target = $region89
    $region88: #{tpu_custom_call.1} parent=1 // pred_region
      %179 = dma.done [#allocation14], 16
    $region89: #{tpu_custom_call.1} parent=1 // pred_fallthru
      _
    // Predicated region
    $region90: #{tpu_custom_call.1} parent=1 // pred_check
      _
    $region91: #{tpu_custom_call.1} parent=1 // pred_check_branch
      %181 = sbr.rel (0) target = $region93
    $region92: #{tpu_custom_call.1} parent=1 // pred_region
      %183 = dma.done [#allocation17], 16
    $region93: #{tpu_custom_call.1} parent=1 // pred_fallthru
      _
    // Predicated region
    $region94: #{tpu_custom_call.1} parent=1 // pred_check
      _
    $region95: #{tpu_custom_call.1} parent=1 // pred_check_branch
      %185 = sbr.rel (0) target = $region97
    $region96: #{tpu_custom_call.1} parent=1 // pred_region
      %187 = dma.done [#allocation17], 1024
    $region97: #{tpu_custom_call.1} parent=1 // pred_fallthru
      _
    %188 = sfence
    %v189 = vlaneseq
    %v190 = vand.u32 %v189, 127
    %vm191 = vcmp.lt.s32.totalorder %v190, 100
    %v192 = vsel %vm191, 1, 0
    %v193 = vcvt.s32.f32 %v192
    %v194 = vld [vmem:[#allocation6] sm:$0xff]
    %v195 = vld [vmem:[#allocation6 + $0x8] sm:$0xff]
    %v196 = vld [vmem:[#allocation6 + $0x10] sm:$0xff]
    %v197 = vld [vmem:[#allocation6 + $0x18] sm:$0xff]
    %v198 = vld [vmem:[#allocation6 + $0x20] sm:$0xff]
    %v199 = vld [vmem:[#allocation6 + $0x28] sm:$0xff]
    %v200 = vld [vmem:[#allocation6 + $0x30] sm:$0xff]
    %v201 = vld [vmem:[#allocation6 + $0x38] sm:$0xff]
    %v202 = vld [vmem:[#allocation6 + $0x40] sm:$0xff]
    %v203 = vld [vmem:[#allocation6 + $0x48] sm:$0xff]
    %v204 = vld [vmem:[#allocation6 + $0x50] sm:$0xff]
    %v205 = vld [vmem:[#allocation6 + $0x58] sm:$0xff]
    %v206 = vld [vmem:[#allocation6 + $0x60] sm:$0xf]
    %v207 = vld [vmem:[#allocation7] sm:$0xf]
    %v208 = vld [vmem:[#allocation7 + $0x4] sm:$0xf]
    %v209 = vld [vmem:[#allocation7 + $0x8] sm:$0xf]
    %v210 = vld [vmem:[#allocation7 + $0xc] sm:$0xf]
    %v211 = vld [vmem:[#allocation7 + $0x10] sm:$0xf]
    %v212 = vld [vmem:[#allocation7 + $0x14] sm:$0xf]
    %v213 = vld [vmem:[#allocation7 + $0x18] sm:$0xf]
    %v214 = vld [vmem:[#allocation7 + $0x1c] sm:$0xf]
    %v215 = vld [vmem:[#allocation7 + $0x20] sm:$0xf]
    %v216 = vld [vmem:[#allocation7 + $0x24] sm:$0xf]
    %v217 = vld [vmem:[#allocation7 + $0x28] sm:$0xf]
    %v218 = vld [vmem:[#allocation7 + $0x2c] sm:$0xf]
    %v219 = vld [vmem:[#allocation7 + $0x30] sm:$0xf]
    %v220 = vld [vmem:[#allocation7 + $0x34] sm:$0xf]
    %v221 = vld [vmem:[#allocation7 + $0x38] sm:$0xf]
    %v222 = vld [vmem:[#allocation7 + $0x3c] sm:$0xf]
    %v223 = vld [vmem:[#allocation7 + $0x40] sm:$0xf]
    %v224 = vld [vmem:[#allocation7 + $0x44] sm:$0xf]
    %v225 = vld [vmem:[#allocation7 + $0x48] sm:$0xf]
    %v226 = vld [vmem:[#allocation7 + $0x4c] sm:$0xf]
    %v227 = vld [vmem:[#allocation7 + $0x50] sm:$0xf]
    %v228 = vld [vmem:[#allocation7 + $0x54] sm:$0xf]
    %v229 = vld [vmem:[#allocation7 + $0x58] sm:$0xf]
    %v230 = vld [vmem:[#allocation7 + $0x5c] sm:$0xf]
    %v231 = vld [vmem:[#allocation7 + $0x60] sm:$0xf]
    %v232 = vld [vmem:[#allocation7 + $0x64] sm:$0xf]
    %v233 = vld [vmem:[#allocation7 + $0x68] sm:$0xf]
    %v234 = vld [vmem:[#allocation7 + $0x6c] sm:$0xf]
    %v235 = vld [vmem:[#allocation7 + $0x70] sm:$0xf]
    %v236 = vld [vmem:[#allocation7 + $0x74] sm:$0xf]
    %v237 = vld [vmem:[#allocation7 + $0x78] sm:$0xf]
    %v238 = vld [vmem:[#allocation7 + $0x7c] sm:$0xf]
    %v239 = vld [vmem:[#allocation7 + $0x80] sm:$0xf]
    %v240 = vld [vmem:[#allocation7 + $0x84] sm:$0xf]
    %v241 = vld [vmem:[#allocation7 + $0x88] sm:$0xf]
    %v242 = vld [vmem:[#allocation7 + $0x8c] sm:$0xf]
    %v243 = vld [vmem:[#allocation7 + $0x90] sm:$0xf]
    %v244 = vld [vmem:[#allocation7 + $0x94] sm:$0xf]
    %v245 = vld [vmem:[#allocation7 + $0x98] sm:$0xf]
    %v246 = vld [vmem:[#allocation7 + $0x9c] sm:$0xf]
    %v247 = vld [vmem:[#allocation7 + $0xa0] sm:$0xf]
    %v248 = vld [vmem:[#allocation7 + $0xa4] sm:$0xf]
    %v249 = vld [vmem:[#allocation7 + $0xa8] sm:$0xf]
    %v250 = vld [vmem:[#allocation7 + $0xac] sm:$0xf]
    %v251 = vld [vmem:[#allocation7 + $0xb0] sm:$0xf]
    %v252 = vld [vmem:[#allocation7 + $0xb4] sm:$0xf]
    %v253 = vld [vmem:[#allocation7 + $0xb8] sm:$0xf]
    %v254 = vld [vmem:[#allocation7 + $0xbc] sm:$0xf]
    %v255 = vld [vmem:[#allocation7 + $0xc0] sm:$0xf]
    %v256 = vld [vmem:[#allocation7 + $0xc4] sm:$0xf]
    %v257 = vld [vmem:[#allocation7 + $0xc8] sm:$0xf]
    %v258 = vld [vmem:[#allocation7 + $0xcc] sm:$0xf]
    %v259 = vld [vmem:[#allocation7 + $0xd0] sm:$0xf]
    %v260 = vld [vmem:[#allocation7 + $0xd4] sm:$0xf]
    %v261 = vld [vmem:[#allocation7 + $0xd8] sm:$0xf]
    %v262 = vld [vmem:[#allocation7 + $0xdc] sm:$0xf]
    %v263 = vld [vmem:[#allocation7 + $0xe0] sm:$0xf]
    %v264 = vld [vmem:[#allocation7 + $0xe4] sm:$0xf]
    %v265 = vld [vmem:[#allocation7 + $0xe8] sm:$0xf]
    %v266 = vld [vmem:[#allocation7 + $0xec] sm:$0xf]
    %v267 = vld [vmem:[#allocation7 + $0xf0] sm:$0xf]
    %v268 = vld [vmem:[#allocation7 + $0xf4] sm:$0xf]
    %v269 = vld [vmem:[#allocation7 + $0xf8] sm:$0xf]
    %v270 = vld [vmem:[#allocation7 + $0xfc] sm:$0xf]
    %v271 = vld [vmem:[#allocation7 + $0x100] sm:$0xf]
    %v272 = vld [vmem:[#allocation7 + $0x104] sm:$0xf]
    %v273 = vld [vmem:[#allocation7 + $0x108] sm:$0xf]
    %v274 = vld [vmem:[#allocation7 + $0x10c] sm:$0xf]
    %v275 = vld [vmem:[#allocation7 + $0x110] sm:$0xf]
    %v276 = vld [vmem:[#allocation7 + $0x114] sm:$0xf]
    %v277 = vld [vmem:[#allocation7 + $0x118] sm:$0xf]
    %v278 = vld [vmem:[#allocation7 + $0x11c] sm:$0xf]
    %v279 = vld [vmem:[#allocation7 + $0x120] sm:$0xf]
    %v280 = vld [vmem:[#allocation7 + $0x124] sm:$0xf]
    %v281 = vld [vmem:[#allocation7 + $0x128] sm:$0xf]
    %v282 = vld [vmem:[#allocation7 + $0x12c] sm:$0xf]
    %v283 = vld [vmem:[#allocation7 + $0x130] sm:$0xf]
    %v284 = vld [vmem:[#allocation7 + $0x134] sm:$0xf]
    %v285 = vld [vmem:[#allocation7 + $0x138] sm:$0xf]
    %v286 = vld [vmem:[#allocation7 + $0x13c] sm:$0xf]
    %v287 = vld [vmem:[#allocation7 + $0x140] sm:$0xf]
    %v288 = vld [vmem:[#allocation7 + $0x144] sm:$0xf]
    %v289 = vld [vmem:[#allocation7 + $0x148] sm:$0xf]
    %v290 = vld [vmem:[#allocation7 + $0x14c] sm:$0xf]
    %v291 = vld [vmem:[#allocation7 + $0x150] sm:$0xf]
    %v292 = vld [vmem:[#allocation7 + $0x154] sm:$0xf]
    %v293 = vld [vmem:[#allocation7 + $0x158] sm:$0xf]
    %v294 = vld [vmem:[#allocation7 + $0x15c] sm:$0xf]
    %v295 = vld [vmem:[#allocation7 + $0x160] sm:$0xf]
    %v296 = vld [vmem:[#allocation7 + $0x164] sm:$0xf]
    %v297 = vld [vmem:[#allocation7 + $0x168] sm:$0xf]
    %v298 = vld [vmem:[#allocation7 + $0x16c] sm:$0xf]
    %v299 = vld [vmem:[#allocation7 + $0x170] sm:$0xf]
    %v300 = vld [vmem:[#allocation7 + $0x174] sm:$0xf]
    %v301 = vld [vmem:[#allocation7 + $0x178] sm:$0xf]
    %v302 = vld [vmem:[#allocation7 + $0x17c] sm:$0xf]
    %v303 = vld [vmem:[#allocation7 + $0x180] sm:$0xf]
    %v304 = vld [vmem:[#allocation7 + $0x184] sm:$0xf]
    %v305 = vld [vmem:[#allocation7 + $0x188] sm:$0xf]
    %v306 = vld [vmem:[#allocation7 + $0x18c] sm:$0xf]
    %v307 = vld [vmem:[#allocation7 + $0x190] sm:$0xf]
    %v308 = vld [vmem:[#allocation7 + $0x194] sm:$0xf]
    %v309 = vld [vmem:[#allocation7 + $0x198] sm:$0xf]
    %v310 = vld [vmem:[#allocation7 + $0x19c] sm:$0xf]
    %v311 = vld [vmem:[#allocation7 + $0x1a0] sm:$0xf]
    %v312 = vld [vmem:[#allocation7 + $0x1a4] sm:$0xf]
    %v313 = vld [vmem:[#allocation7 + $0x1a8] sm:$0xf]
    %v314 = vld [vmem:[#allocation7 + $0x1ac] sm:$0xf]
    %v315 = vld [vmem:[#allocation7 + $0x1b0] sm:$0xf]
    %v316 = vld [vmem:[#allocation7 + $0x1b4] sm:$0xf]
    %v317 = vld [vmem:[#allocation7 + $0x1b8] sm:$0xf]
    %v318 = vld [vmem:[#allocation7 + $0x1bc] sm:$0xf]
    %v319 = vld [vmem:[#allocation7 + $0x1c0] sm:$0xf]
    %v320 = vld [vmem:[#allocation7 + $0x1c4] sm:$0xf]
    %v321 = vld [vmem:[#allocation7 + $0x1c8] sm:$0xf]
    %v322 = vld [vmem:[#allocation7 + $0x1cc] sm:$0xf]
    %v323 = vld [vmem:[#allocation7 + $0x1d0] sm:$0xf]
    %v324 = vld [vmem:[#allocation7 + $0x1d4] sm:$0xf]
    %v325 = vld [vmem:[#allocation7 + $0x1d8] sm:$0xf]
    %v326 = vld [vmem:[#allocation7 + $0x1dc] sm:$0xf]
    %v327 = vld [vmem:[#allocation7 + $0x1e0] sm:$0xf]
    %v328 = vld [vmem:[#allocation7 + $0x1e4] sm:$0xf]
    %v329 = vld [vmem:[#allocation7 + $0x1e8] sm:$0xf]
    %v330 = vld [vmem:[#allocation7 + $0x1ec] sm:$0xf]
    %v331 = vld [vmem:[#allocation7 + $0x1f0] sm:$0xf]
    %v332 = vld [vmem:[#allocation7 + $0x1f4] sm:$0xf]
    %v333 = vld [vmem:[#allocation7 + $0x1f8] sm:$0xf]
    %v334 = vld [vmem:[#allocation7 + $0x1fc] sm:$0xf]
    %v335 = vld [vmem:[#allocation7 + $0x200] sm:$0xf]
    %v336 = vld [vmem:[#allocation7 + $0x204] sm:$0xf]
    %v337 = vld [vmem:[#allocation7 + $0x208] sm:$0xf]
    %v338 = vld [vmem:[#allocation7 + $0x20c] sm:$0xf]
    %v339 = vld [vmem:[#allocation7 + $0x210] sm:$0xf]
    %v340 = vld [vmem:[#allocation7 + $0x214] sm:$0xf]
    %v341 = vld [vmem:[#allocation7 + $0x218] sm:$0xf]
    %v342 = vld [vmem:[#allocation7 + $0x21c] sm:$0xf]
    %v343 = vld [vmem:[#allocation7 + $0x220] sm:$0xf]
    %v344 = vld [vmem:[#allocation7 + $0x224] sm:$0xf]
    %v345 = vld [vmem:[#allocation7 + $0x228] sm:$0xf]
    %v346 = vld [vmem:[#allocation7 + $0x22c] sm:$0xf]
    %v347 = vld [vmem:[#allocation7 + $0x230] sm:$0xf]
    %v348 = vld [vmem:[#allocation7 + $0x234] sm:$0xf]
    %v349 = vld [vmem:[#allocation7 + $0x238] sm:$0xf]
    %v350 = vld [vmem:[#allocation7 + $0x23c] sm:$0xf]
    %v351 = vld [vmem:[#allocation7 + $0x240] sm:$0xf]
    %v352 = vld [vmem:[#allocation7 + $0x244] sm:$0xf]
    %v353 = vld [vmem:[#allocation7 + $0x248] sm:$0xf]
    %v354 = vld [vmem:[#allocation7 + $0x24c] sm:$0xf]
    %v355 = vld [vmem:[#allocation7 + $0x250] sm:$0xf]
    %v356 = vld [vmem:[#allocation7 + $0x254] sm:$0xf]
    %v357 = vld [vmem:[#allocation7 + $0x258] sm:$0xf]
    %v358 = vld [vmem:[#allocation7 + $0x25c] sm:$0xf]
    %v359 = vld [vmem:[#allocation7 + $0x260] sm:$0xf]
    %v360 = vld [vmem:[#allocation7 + $0x264] sm:$0xf]
    %v361 = vld [vmem:[#allocation7 + $0x268] sm:$0xf]
    %v362 = vld [vmem:[#allocation7 + $0x26c] sm:$0xf]
    %v363 = vld [vmem:[#allocation7 + $0x270] sm:$0xf]
    %v364 = vld [vmem:[#allocation7 + $0x274] sm:$0xf]
    %v365 = vld [vmem:[#allocation7 + $0x278] sm:$0xf]
    %v366 = vld [vmem:[#allocation7 + $0x27c] sm:$0xf]
    %v367 = vld [vmem:[#allocation7 + $0x280] sm:$0xf]
    %v368 = vld [vmem:[#allocation7 + $0x284] sm:$0xf]
    %v369 = vld [vmem:[#allocation7 + $0x288] sm:$0xf]
    %v370 = vld [vmem:[#allocation7 + $0x28c] sm:$0xf]
    %v371 = vld [vmem:[#allocation7 + $0x290] sm:$0xf]
    %v372 = vld [vmem:[#allocation7 + $0x294] sm:$0xf]
    %v373 = vld [vmem:[#allocation7 + $0x298] sm:$0xf]
    %v374 = vld [vmem:[#allocation7 + $0x29c] sm:$0xf]
    %v375 = vld [vmem:[#allocation7 + $0x2a0] sm:$0xf]
    %v376 = vld [vmem:[#allocation7 + $0x2a4] sm:$0xf]
    %v377 = vld [vmem:[#allocation7 + $0x2a8] sm:$0xf]
    %v378 = vld [vmem:[#allocation7 + $0x2ac] sm:$0xf]
    %v379 = vld [vmem:[#allocation7 + $0x2b0] sm:$0xf]
    %v380 = vld [vmem:[#allocation7 + $0x2b4] sm:$0xf]
    %v381 = vld [vmem:[#allocation7 + $0x2b8] sm:$0xf]
    %v382 = vld [vmem:[#allocation7 + $0x2bc] sm:$0xf]
    %v383 = vld [vmem:[#allocation7 + $0x2c0] sm:$0xf]
    %v384 = vld [vmem:[#allocation7 + $0x2c4] sm:$0xf]
    %v385 = vld [vmem:[#allocation7 + $0x2c8] sm:$0xf]
    %v386 = vld [vmem:[#allocation7 + $0x2cc] sm:$0xf]
    %v387 = vld [vmem:[#allocation7 + $0x2d0] sm:$0xf]
    %v388 = vld [vmem:[#allocation7 + $0x2d4] sm:$0xf]
    %v389 = vld [vmem:[#allocation7 + $0x2d8] sm:$0xf]
    %v390 = vld [vmem:[#allocation7 + $0x2dc] sm:$0xf]
    %v391 = vld [vmem:[#allocation7 + $0x2e0] sm:$0xf]
    %v392 = vld [vmem:[#allocation7 + $0x2e4] sm:$0xf]
    %v393 = vld [vmem:[#allocation7 + $0x2e8] sm:$0xf]
    %v394 = vld [vmem:[#allocation7 + $0x2ec] sm:$0xf]
    %v395 = vld [vmem:[#allocation7 + $0x2f0] sm:$0xf]
    %v396 = vld [vmem:[#allocation7 + $0x2f4] sm:$0xf]
    %v397 = vld [vmem:[#allocation7 + $0x2f8] sm:$0xf]
    %v398 = vld [vmem:[#allocation7 + $0x2fc] sm:$0xf]
    %v399 = vld [vmem:[#allocation7 + $0x300] sm:$0xf]
    %v400 = vld [vmem:[#allocation7 + $0x304] sm:$0xf]
    %v401 = vld [vmem:[#allocation7 + $0x308] sm:$0xf]
    %v402 = vld [vmem:[#allocation7 + $0x30c] sm:$0xf]
    %v403 = vld [vmem:[#allocation7 + $0x310] sm:$0xf]
    %v404 = vld [vmem:[#allocation7 + $0x314] sm:$0xf]
    %v405 = vld [vmem:[#allocation7 + $0x318] sm:$0xf]
    %v406 = vld [vmem:[#allocation7 + $0x31c] sm:$0xf]
    %v407 = vld [vmem:[#allocation7 + $0x320] sm:$0xf]
    %v408 = vld [vmem:[#allocation7 + $0x324] sm:$0xf]
    %v409 = vld [vmem:[#allocation7 + $0x328] sm:$0xf]
    %v410 = vld [vmem:[#allocation7 + $0x32c] sm:$0xf]
    %v411 = vld [vmem:[#allocation7 + $0x330] sm:$0xf]
    %v412 = vld [vmem:[#allocation7 + $0x334] sm:$0xf]
    %v413 = vld [vmem:[#allocation7 + $0x338] sm:$0xf]
    %v414 = vld [vmem:[#allocation7 + $0x33c] sm:$0xf]
    %v415 = vld [vmem:[#allocation7 + $0x340] sm:$0xf]
    %v416 = vld [vmem:[#allocation7 + $0x344] sm:$0xf]
    %v417 = vld [vmem:[#allocation7 + $0x348] sm:$0xf]
    %v418 = vld [vmem:[#allocation7 + $0x34c] sm:$0xf]
    %v419 = vld [vmem:[#allocation7 + $0x350] sm:$0xf]
    %v420 = vld [vmem:[#allocation7 + $0x354] sm:$0xf]
    %v421 = vld [vmem:[#allocation7 + $0x358] sm:$0xf]
    %v422 = vld [vmem:[#allocation7 + $0x35c] sm:$0xf]
    %v423 = vld [vmem:[#allocation7 + $0x360] sm:$0xf]
    %v424 = vld [vmem:[#allocation7 + $0x364] sm:$0xf]
    %v425 = vld [vmem:[#allocation7 + $0x368] sm:$0xf]
    %v426 = vld [vmem:[#allocation7 + $0x36c] sm:$0xf]
    %v427 = vld [vmem:[#allocation7 + $0x370] sm:$0xf]
    %v428 = vld [vmem:[#allocation7 + $0x374] sm:$0xf]
    %v429 = vld [vmem:[#allocation7 + $0x378] sm:$0xf]
    %v430 = vld [vmem:[#allocation7 + $0x37c] sm:$0xf]
    %v431 = vld [vmem:[#allocation7 + $0x380] sm:$0xf]
    %v432 = vld [vmem:[#allocation7 + $0x384] sm:$0xf]
    %v433 = vld [vmem:[#allocation7 + $0x388] sm:$0xf]
    %v434 = vld [vmem:[#allocation7 + $0x38c] sm:$0xf]
    %v435 = vld [vmem:[#allocation7 + $0x390] sm:$0xf]
    %v436 = vld [vmem:[#allocation7 + $0x394] sm:$0xf]
    %v437 = vld [vmem:[#allocation7 + $0x398] sm:$0xf]
    %v438 = vld [vmem:[#allocation7 + $0x39c] sm:$0xf]
    %v439 = vld [vmem:[#allocation7 + $0x3a0] sm:$0xf]
    %v440 = vld [vmem:[#allocation7 + $0x3a4] sm:$0xf]
    %v441 = vld [vmem:[#allocation7 + $0x3a8] sm:$0xf]
    %v442 = vld [vmem:[#allocation7 + $0x3ac] sm:$0xf]
    %v443 = vld [vmem:[#allocation7 + $0x3b0] sm:$0xf]
    %v444 = vld [vmem:[#allocation7 + $0x3b4] sm:$0xf]
    %v445 = vld [vmem:[#allocation7 + $0x3b8] sm:$0xf]
    %v446 = vld [vmem:[#allocation7 + $0x3bc] sm:$0xf]
    %v447 = vld [vmem:[#allocation7 + $0x3c0] sm:$0xf]
    %v448 = vld [vmem:[#allocation7 + $0x3c4] sm:$0xf]
    %v449 = vld [vmem:[#allocation7 + $0x3c8] sm:$0xf]
    %v450 = vld [vmem:[#allocation7 + $0x3cc] sm:$0xf]
    %v451 = vld [vmem:[#allocation7 + $0x3d0] sm:$0xf]
    %v452 = vld [vmem:[#allocation7 + $0x3d4] sm:$0xf]
    %v453 = vld [vmem:[#allocation7 + $0x3d8] sm:$0xf]
    %v454 = vld [vmem:[#allocation7 + $0x3dc] sm:$0xf]
    %v455 = vld [vmem:[#allocation7 + $0x3e0] sm:$0xf]
    %v456 = vld [vmem:[#allocation7 + $0x3e4] sm:$0xf]
    %v457 = vld [vmem:[#allocation7 + $0x3e8] sm:$0xf]
    %v458 = vld [vmem:[#allocation7 + $0x3ec] sm:$0xf]
    %v459 = vld [vmem:[#allocation7 + $0x3f0] sm:$0xf]
    %v460 = vld [vmem:[#allocation7 + $0x3f4] sm:$0xf]
    %v461 = vld [vmem:[#allocation7 + $0x3f8] sm:$0xf]
    %v462 = vld [vmem:[#allocation7 + $0x3fc] sm:$0xf]
    %v463 = vld [vmem:[#allocation7 + $0x400] sm:$0xf]
    %v464 = vld [vmem:[#allocation7 + $0x404] sm:$0xf]
    %v465 = vld [vmem:[#allocation7 + $0x408] sm:$0xf]
    %v466 = vld [vmem:[#allocation7 + $0x40c] sm:$0xf]
    %v467 = vld [vmem:[#allocation7 + $0x410] sm:$0xf]
    %v468 = vld [vmem:[#allocation7 + $0x414] sm:$0xf]
    %v469 = vld [vmem:[#allocation7 + $0x418] sm:$0xf]
    %v470 = vld [vmem:[#allocation7 + $0x41c] sm:$0xf]
    %v471 = vld [vmem:[#allocation7 + $0x420] sm:$0xf]
    %v472 = vld [vmem:[#allocation7 + $0x424] sm:$0xf]
    %v473 = vld [vmem:[#allocation7 + $0x428] sm:$0xf]
    %v474 = vld [vmem:[#allocation7 + $0x42c] sm:$0xf]
    %v475 = vld [vmem:[#allocation7 + $0x430] sm:$0xf]
    %v476 = vld [vmem:[#allocation7 + $0x434] sm:$0xf]
    %v477 = vld [vmem:[#allocation7 + $0x438] sm:$0xf]
    %v478 = vld [vmem:[#allocation7 + $0x43c] sm:$0xf]
    %v479 = vld [vmem:[#allocation7 + $0x440] sm:$0xf]
    %v480 = vld [vmem:[#allocation7 + $0x444] sm:$0xf]
    %v481 = vld [vmem:[#allocation7 + $0x448] sm:$0xf]
    %v482 = vld [vmem:[#allocation7 + $0x44c] sm:$0xf]
    %v483 = vld [vmem:[#allocation7 + $0x450] sm:$0xf]
    %v484 = vld [vmem:[#allocation7 + $0x454] sm:$0xf]
    %v485 = vld [vmem:[#allocation7 + $0x458] sm:$0xf]
    %v486 = vld [vmem:[#allocation7 + $0x45c] sm:$0xf]
    %v487 = vld [vmem:[#allocation7 + $0x460] sm:$0xf]
    %v488 = vld [vmem:[#allocation7 + $0x464] sm:$0xf]
    %v489 = vld [vmem:[#allocation7 + $0x468] sm:$0xf]
    %v490 = vld [vmem:[#allocation7 + $0x46c] sm:$0xf]
    %v491 = vld [vmem:[#allocation7 + $0x470] sm:$0xf]
    %v492 = vld [vmem:[#allocation7 + $0x474] sm:$0xf]
    %v493 = vld [vmem:[#allocation7 + $0x478] sm:$0xf]
    %v494 = vld [vmem:[#allocation7 + $0x47c] sm:$0xf]
    %v495 = vld [vmem:[#allocation7 + $0x480] sm:$0xf]
    %v496 = vld [vmem:[#allocation7 + $0x484] sm:$0xf]
    %v497 = vld [vmem:[#allocation7 + $0x488] sm:$0xf]
    %v498 = vld [vmem:[#allocation7 + $0x48c] sm:$0xf]
    %v499 = vld [vmem:[#allocation7 + $0x490] sm:$0xf]
    %v500 = vld [vmem:[#allocation7 + $0x494] sm:$0xf]
    %v501 = vld [vmem:[#allocation7 + $0x498] sm:$0xf]
    %v502 = vld [vmem:[#allocation7 + $0x49c] sm:$0xf]
    %v503 = vld [vmem:[#allocation7 + $0x4a0] sm:$0xf]
    %v504 = vld [vmem:[#allocation7 + $0x4a4] sm:$0xf]
    %v505 = vld [vmem:[#allocation7 + $0x4a8] sm:$0xf]
    %v506 = vld [vmem:[#allocation7 + $0x4ac] sm:$0xf]
    %v507 = vld [vmem:[#allocation7 + $0x4b0] sm:$0xf]
    %v508 = vld [vmem:[#allocation7 + $0x4b4] sm:$0xf]
    %v509 = vld [vmem:[#allocation7 + $0x4b8] sm:$0xf]
    %v510 = vld [vmem:[#allocation7 + $0x4bc] sm:$0xf]
    %v511 = vld [vmem:[#allocation7 + $0x4c0] sm:$0xf]
    %v512 = vld [vmem:[#allocation7 + $0x4c4] sm:$0xf]
    %v513 = vld [vmem:[#allocation7 + $0x4c8] sm:$0xf]
    %v514 = vld [vmem:[#allocation7 + $0x4cc] sm:$0xf]
    %v515 = vld [vmem:[#allocation7 + $0x4d0] sm:$0xf]
    %v516 = vld [vmem:[#allocation7 + $0x4d4] sm:$0xf]
    %v517 = vld [vmem:[#allocation7 + $0x4d8] sm:$0xf]
    %v518 = vld [vmem:[#allocation7 + $0x4dc] sm:$0xf]
    %v519 = vld [vmem:[#allocation7 + $0x4e0] sm:$0xf]
    %v520 = vld [vmem:[#allocation7 + $0x4e4] sm:$0xf]
    %v521 = vld [vmem:[#allocation7 + $0x4e8] sm:$0xf]
    %v522 = vld [vmem:[#allocation7 + $0x4ec] sm:$0xf]
    %v523 = vld [vmem:[#allocation7 + $0x4f0] sm:$0xf]
    %v524 = vld [vmem:[#allocation7 + $0x4f4] sm:$0xf]
    %v525 = vld [vmem:[#allocation7 + $0x4f8] sm:$0xf]
    %v526 = vld [vmem:[#allocation7 + $0x4fc] sm:$0xf]
    %v527 = vld [vmem:[#allocation7 + $0x500] sm:$0xf]
    %v528 = vld [vmem:[#allocation7 + $0x504] sm:$0xf]
    %v529 = vld [vmem:[#allocation7 + $0x508] sm:$0xf]
    %v530 = vld [vmem:[#allocation7 + $0x50c] sm:$0xf]
    %v531 = vld [vmem:[#allocation7 + $0x510] sm:$0xf]
    %v532 = vld [vmem:[#allocation7 + $0x514] sm:$0xf]
    %v533 = vld [vmem:[#allocation7 + $0x518] sm:$0xf]
    %v534 = vld [vmem:[#allocation7 + $0x51c] sm:$0xf]
    %v535 = vld [vmem:[#allocation7 + $0x520] sm:$0xf]
    %v536 = vld [vmem:[#allocation7 + $0x524] sm:$0xf]
    %v537 = vld [vmem:[#allocation7 + $0x528] sm:$0xf]
    %v538 = vld [vmem:[#allocation7 + $0x52c] sm:$0xf]
    %v539 = vld [vmem:[#allocation7 + $0x530] sm:$0xf]
    %v540 = vld [vmem:[#allocation7 + $0x534] sm:$0xf]
    %v541 = vld [vmem:[#allocation7 + $0x538] sm:$0xf]
    %v542 = vld [vmem:[#allocation7 + $0x53c] sm:$0xf]
    %v543 = vld [vmem:[#allocation7 + $0x540] sm:$0xf]
    %v544 = vld [vmem:[#allocation7 + $0x544] sm:$0xf]
    %v545 = vld [vmem:[#allocation7 + $0x548] sm:$0xf]
    %v546 = vld [vmem:[#allocation7 + $0x54c] sm:$0xf]
    %v547 = vld [vmem:[#allocation7 + $0x550] sm:$0xf]
    %v548 = vld [vmem:[#allocation7 + $0x554] sm:$0xf]
    %v549 = vld [vmem:[#allocation7 + $0x558] sm:$0xf]
    %v550 = vld [vmem:[#allocation7 + $0x55c] sm:$0xf]
    %v551 = vld [vmem:[#allocation7 + $0x560] sm:$0xf]
    %v552 = vld [vmem:[#allocation7 + $0x564] sm:$0xf]
    %v553 = vld [vmem:[#allocation7 + $0x568] sm:$0xf]
    %v554 = vld [vmem:[#allocation7 + $0x56c] sm:$0xf]
    %v555 = vld [vmem:[#allocation7 + $0x570] sm:$0xf]
    %v556 = vld [vmem:[#allocation7 + $0x574] sm:$0xf]
    %v557 = vld [vmem:[#allocation7 + $0x578] sm:$0xf]
    %v558 = vld [vmem:[#allocation7 + $0x57c] sm:$0xf]
    %v559 = vld [vmem:[#allocation7 + $0x580] sm:$0xf]
    %v560 = vld [vmem:[#allocation7 + $0x584] sm:$0xf]
    %v561 = vld [vmem:[#allocation7 + $0x588] sm:$0xf]
    %v562 = vld [vmem:[#allocation7 + $0x58c] sm:$0xf]
    %v563 = vld [vmem:[#allocation7 + $0x590] sm:$0xf]
    %v564 = vld [vmem:[#allocation7 + $0x594] sm:$0xf]
    %v565 = vld [vmem:[#allocation7 + $0x598] sm:$0xf]
    %v566 = vld [vmem:[#allocation7 + $0x59c] sm:$0xf]
    %v567 = vld [vmem:[#allocation7 + $0x5a0] sm:$0xf]
    %v568 = vld [vmem:[#allocation7 + $0x5a4] sm:$0xf]
    %v569 = vld [vmem:[#allocation7 + $0x5a8] sm:$0xf]
    %v570 = vld [vmem:[#allocation7 + $0x5ac] sm:$0xf]
    %v571 = vld [vmem:[#allocation7 + $0x5b0] sm:$0xf]
    %v572 = vld [vmem:[#allocation7 + $0x5b4] sm:$0xf]
    %v573 = vld [vmem:[#allocation7 + $0x5b8] sm:$0xf]
    %v574 = vld [vmem:[#allocation7 + $0x5bc] sm:$0xf]
    %v575 = vld [vmem:[#allocation7 + $0x5c0] sm:$0xf]
    %v576 = vld [vmem:[#allocation7 + $0x5c4] sm:$0xf]
    %v577 = vld [vmem:[#allocation7 + $0x5c8] sm:$0xf]
    %v578 = vld [vmem:[#allocation7 + $0x5cc] sm:$0xf]
    %v579 = vld [vmem:[#allocation7 + $0x5d0] sm:$0xf]
    %v580 = vld [vmem:[#allocation7 + $0x5d4] sm:$0xf]
    %v581 = vld [vmem:[#allocation7 + $0x5d8] sm:$0xf]
    %v582 = vld [vmem:[#allocation7 + $0x5dc] sm:$0xf]
    %v583 = vld [vmem:[#allocation7 + $0x5e0] sm:$0xf]
    %v584 = vld [vmem:[#allocation7 + $0x5e4] sm:$0xf]
    %v585 = vld [vmem:[#allocation7 + $0x5e8] sm:$0xf]
    %v586 = vld [vmem:[#allocation7 + $0x5ec] sm:$0xf]
    %v587 = vld [vmem:[#allocation7 + $0x5f0] sm:$0xf]
    %v588 = vld [vmem:[#allocation7 + $0x5f4] sm:$0xf]
    %v589 = vld [vmem:[#allocation7 + $0x5f8] sm:$0xf]
    %v590 = vld [vmem:[#allocation7 + $0x5fc] sm:$0xf]
    %v591 = vld [vmem:[#allocation7 + $0x600] sm:$0xf]
    %v592 = vld [vmem:[#allocation7 + $0x604] sm:$0xf]
    %v593 = vld [vmem:[#allocation7 + $0x608] sm:$0xf]
    %v594 = vld [vmem:[#allocation7 + $0x60c] sm:$0xf]
    %v595 = vld [vmem:[#allocation7 + $0x610] sm:$0xf]
    %v596 = vld [vmem:[#allocation7 + $0x614] sm:$0xf]
    %v597 = vld [vmem:[#allocation7 + $0x618] sm:$0xf]
    %v598 = vld [vmem:[#allocation7 + $0x61c] sm:$0xf]
    %v599 = vld [vmem:[#allocation7 + $0x620] sm:$0xf]
    %v600 = vld [vmem:[#allocation7 + $0x624] sm:$0xf]
    %v601 = vld [vmem:[#allocation7 + $0x628] sm:$0xf]
    %v602 = vld [vmem:[#allocation7 + $0x62c] sm:$0xf]
    %v603 = vld [vmem:[#allocation7 + $0x630] sm:$0xf]
    %v604 = vld [vmem:[#allocation7 + $0x634] sm:$0xf]
    %v605 = vld [vmem:[#allocation7 + $0x638] sm:$0xf]
    %v606 = vld [vmem:[#allocation7 + $0x63c] sm:$0xf]
    %v607 = vld [vmem:[%s3] sm:$0x1]
    %v609 = vperm.slane %v607, 0
    %v624 = vunpack.c.l.b16 %v194
    %v625 = vunpack.c.h.b16 %v194
    %v626 = vunpack.c.l.b16 %v195
    %v627 = vunpack.c.h.b16 %v195
    %v628 = vunpack.c.l.b16 %v196
    %v629 = vunpack.c.h.b16 %v196
    %v630 = vunpack.c.l.b16 %v197
    %v631 = vunpack.c.h.b16 %v197
    %v632 = vunpack.c.l.b16 %v198
    %v633 = vunpack.c.h.b16 %v198
    %v634 = vunpack.c.l.b16 %v199
    %v635 = vunpack.c.h.b16 %v199
    %v636 = vunpack.c.l.b16 %v200
    %v637 = vunpack.c.h.b16 %v200
    %v638 = vunpack.c.l.b16 %v201
    %v639 = vunpack.c.h.b16 %v201
    %v640 = vunpack.c.l.b16 %v202
    %v641 = vunpack.c.h.b16 %v202
    %v642 = vunpack.c.l.b16 %v203
    %v643 = vunpack.c.h.b16 %v203
    %v644 = vunpack.c.l.b16 %v204
    %v645 = vunpack.c.h.b16 %v204
    %v646 = vunpack.c.l.b16 %v205
    %v647 = vunpack.c.h.b16 %v205
    %v648 = vunpack.c.l.b16 %v206
    %v649 = vpack.c.b16 %v624, %v624
    %v650 = vpack.c.b16 %v625, %v625
    %v651 = vpack.c.b16 %v626, %v626
    %v652 = vpack.c.b16 %v627, %v627
    %v653 = vpack.c.b16 %v628, %v628
    %v654 = vpack.c.b16 %v629, %v629
    %v655 = vpack.c.b16 %v630, %v630
    %v656 = vpack.c.b16 %v631, %v631
    %v657 = vpack.c.b16 %v632, %v632
    %v658 = vpack.c.b16 %v633, %v633
    %v659 = vpack.c.b16 %v634, %v634
    %v660 = vpack.c.b16 %v635, %v635
    %v661 = vpack.c.b16 %v636, %v636
    %v662 = vpack.c.b16 %v637, %v637
    %v663 = vpack.c.b16 %v638, %v638
    %v664 = vpack.c.b16 %v639, %v639
    %v665 = vpack.c.b16 %v640, %v640
    %v666 = vpack.c.b16 %v641, %v641
    %v667 = vpack.c.b16 %v642, %v642
    %v668 = vpack.c.b16 %v643, %v643
    %v669 = vpack.c.b16 %v644, %v644
    %v670 = vpack.c.b16 %v645, %v645
    %v671 = vpack.c.b16 %v646, %v646
    %v672 = vpack.c.b16 %v647, %v647
    %v673 = vpack.c.b16 %v648, %v648
    %v1099 = vunpack.c.l.b16 %v207
    %v1100 = vunpack.c.l.b16 %v208
    %v1101 = vunpack.c.l.b16 %v209
    %v1102 = vunpack.c.l.b16 %v210
    %v1103 = vunpack.c.l.b16 %v211
    %v1104 = vunpack.c.l.b16 %v212
    %v1105 = vunpack.c.l.b16 %v213
    %v1106 = vunpack.c.l.b16 %v214
    %v1107 = vunpack.c.l.b16 %v215
    %v1108 = vunpack.c.l.b16 %v216
    %v1109 = vunpack.c.l.b16 %v217
    %v1110 = vunpack.c.l.b16 %v218
    %v1111 = vunpack.c.l.b16 %v219
    %v1112 = vunpack.c.l.b16 %v220
    %v1113 = vunpack.c.l.b16 %v221
    %v1114 = vunpack.c.l.b16 %v222
    %v1115 = vunpack.c.l.b16 %v223
    %v1116 = vunpack.c.l.b16 %v224
    %v1117 = vunpack.c.l.b16 %v225
    %v1118 = vunpack.c.l.b16 %v226
    %v1119 = vunpack.c.l.b16 %v227
    %v1120 = vunpack.c.l.b16 %v228
    %v1121 = vunpack.c.l.b16 %v229
    %v1122 = vunpack.c.l.b16 %v230
    %v1123 = vunpack.c.l.b16 %v231
    %v1124 = vunpack.c.l.b16 %v232
    %v1125 = vunpack.c.l.b16 %v233
    %v1126 = vunpack.c.l.b16 %v234
    %v1127 = vunpack.c.l.b16 %v235
    %v1128 = vunpack.c.l.b16 %v236
    %v1129 = vunpack.c.l.b16 %v237
    %v1130 = vunpack.c.l.b16 %v238
    %v1131 = vunpack.c.l.b16 %v239
    %v1132 = vunpack.c.l.b16 %v240
    %v1133 = vunpack.c.l.b16 %v241
    %v1134 = vunpack.c.l.b16 %v242
    %v1135 = vunpack.c.l.b16 %v243
    %v1136 = vunpack.c.l.b16 %v244
    %v1137 = vunpack.c.l.b16 %v245
    %v1138 = vunpack.c.l.b16 %v246
    %v1139 = vunpack.c.l.b16 %v247
    %v1140 = vunpack.c.l.b16 %v248
    %v1141 = vunpack.c.l.b16 %v249
    %v1142 = vunpack.c.l.b16 %v250
    %v1143 = vunpack.c.l.b16 %v251
    %v1144 = vunpack.c.l.b16 %v252
    %v1145 = vunpack.c.l.b16 %v253
    %v1146 = vunpack.c.l.b16 %v254
    %v1147 = vunpack.c.l.b16 %v255
    %v1148 = vunpack.c.l.b16 %v256
    %v1149 = vunpack.c.l.b16 %v257
    %v1150 = vunpack.c.l.b16 %v258
    %v1151 = vunpack.c.l.b16 %v259
    %v1152 = vunpack.c.l.b16 %v260
    %v1153 = vunpack.c.l.b16 %v261
    %v1154 = vunpack.c.l.b16 %v262
    %v1155 = vunpack.c.l.b16 %v263
    %v1156 = vunpack.c.l.b16 %v264
    %v1157 = vunpack.c.l.b16 %v265
    %v1158 = vunpack.c.l.b16 %v266
    %v1159 = vunpack.c.l.b16 %v267
    %v1160 = vunpack.c.l.b16 %v268
    %v1161 = vunpack.c.l.b16 %v269
    %v1162 = vunpack.c.l.b16 %v270
    %v1163 = vunpack.c.l.b16 %v271
    %v1164 = vunpack.c.l.b16 %v272
    %v1165 = vunpack.c.l.b16 %v273
    %v1166 = vunpack.c.l.b16 %v274
    %v1167 = vunpack.c.l.b16 %v275
    %v1168 = vunpack.c.l.b16 %v276
    %v1169 = vunpack.c.l.b16 %v277
    %v1170 = vunpack.c.l.b16 %v278
    %v1171 = vunpack.c.l.b16 %v279
    %v1172 = vunpack.c.l.b16 %v280
    %v1173 = vunpack.c.l.b16 %v281
    %v1174 = vunpack.c.l.b16 %v282
    %v1175 = vunpack.c.l.b16 %v283
    %v1176 = vunpack.c.l.b16 %v284
    %v1177 = vunpack.c.l.b16 %v285
    %v1178 = vunpack.c.l.b16 %v286
    %v1179 = vunpack.c.l.b16 %v287
    %v1180 = vunpack.c.l.b16 %v288
    %v1181 = vunpack.c.l.b16 %v289
    %v1182 = vunpack.c.l.b16 %v290
    %v1183 = vunpack.c.l.b16 %v291
    %v1184 = vunpack.c.l.b16 %v292
    %v1185 = vunpack.c.l.b16 %v293
    %v1186 = vunpack.c.l.b16 %v294
    %v1187 = vunpack.c.l.b16 %v295
    %v1188 = vunpack.c.l.b16 %v296
    %v1189 = vunpack.c.l.b16 %v297
    %v1190 = vunpack.c.l.b16 %v298
    %v1191 = vunpack.c.l.b16 %v299
    %v1192 = vunpack.c.l.b16 %v300
    %v1193 = vunpack.c.l.b16 %v301
    %v1194 = vunpack.c.l.b16 %v302
    %v1195 = vunpack.c.l.b16 %v303
    %v1196 = vunpack.c.l.b16 %v304
    %v1197 = vunpack.c.l.b16 %v305
    %v1198 = vunpack.c.l.b16 %v306
    %v1199 = vunpack.c.l.b16 %v307
    %v1200 = vunpack.c.l.b16 %v308
    %v1201 = vunpack.c.l.b16 %v309
    %v1202 = vunpack.c.l.b16 %v310
    %v1203 = vunpack.c.l.b16 %v311
    %v1204 = vunpack.c.l.b16 %v312
    %v1205 = vunpack.c.l.b16 %v313
    %v1206 = vunpack.c.l.b16 %v314
    %v1207 = vunpack.c.l.b16 %v315
    %v1208 = vunpack.c.l.b16 %v316
    %v1209 = vunpack.c.l.b16 %v317
    %v1210 = vunpack.c.l.b16 %v318
    %v1211 = vunpack.c.l.b16 %v319
    %v1212 = vunpack.c.l.b16 %v320
    %v1213 = vunpack.c.l.b16 %v321
    %v1214 = vunpack.c.l.b16 %v322
    %v1215 = vunpack.c.l.b16 %v323
    %v1216 = vunpack.c.l.b16 %v324
    %v1217 = vunpack.c.l.b16 %v325
    %v1218 = vunpack.c.l.b16 %v326
    %v1219 = vunpack.c.l.b16 %v327
    %v1220 = vunpack.c.l.b16 %v328
    %v1221 = vunpack.c.l.b16 %v329
    %v1222 = vunpack.c.l.b16 %v330
    %v1223 = vunpack.c.l.b16 %v331
    %v1224 = vunpack.c.l.b16 %v332
    %v1225 = vunpack.c.l.b16 %v333
    %v1226 = vunpack.c.l.b16 %v334
    %v1227 = vunpack.c.l.b16 %v335
    %v1228 = vunpack.c.l.b16 %v336
    %v1229 = vunpack.c.l.b16 %v337
    %v1230 = vunpack.c.l.b16 %v338
    %v1231 = vunpack.c.l.b16 %v339
    %v1232 = vunpack.c.l.b16 %v340
    %v1233 = vunpack.c.l.b16 %v341
    %v1234 = vunpack.c.l.b16 %v342
    %v1235 = vunpack.c.l.b16 %v343
    %v1236 = vunpack.c.l.b16 %v344
    %v1237 = vunpack.c.l.b16 %v345
    %v1238 = vunpack.c.l.b16 %v346
    %v1239 = vunpack.c.l.b16 %v347
    %v1240 = vunpack.c.l.b16 %v348
    %v1241 = vunpack.c.l.b16 %v349
    %v1242 = vunpack.c.l.b16 %v350
    %v1243 = vunpack.c.l.b16 %v351
    %v1244 = vunpack.c.l.b16 %v352
    %v1245 = vunpack.c.l.b16 %v353
    %v1246 = vunpack.c.l.b16 %v354
    %v1247 = vunpack.c.l.b16 %v355
    %v1248 = vunpack.c.l.b16 %v356
    %v1249 = vunpack.c.l.b16 %v357
    %v1250 = vunpack.c.l.b16 %v358
    %v1251 = vunpack.c.l.b16 %v359
    %v1252 = vunpack.c.l.b16 %v360
    %v1253 = vunpack.c.l.b16 %v361
    %v1254 = vunpack.c.l.b16 %v362
    %v1255 = vunpack.c.l.b16 %v363
    %v1256 = vunpack.c.l.b16 %v364
    %v1257 = vunpack.c.l.b16 %v365
    %v1258 = vunpack.c.l.b16 %v366
    %v1259 = vunpack.c.l.b16 %v367
    %v1260 = vunpack.c.l.b16 %v368
    %v1261 = vunpack.c.l.b16 %v369
    %v1262 = vunpack.c.l.b16 %v370
    %v1263 = vunpack.c.l.b16 %v371
    %v1264 = vunpack.c.l.b16 %v372
    %v1265 = vunpack.c.l.b16 %v373
    %v1266 = vunpack.c.l.b16 %v374
    %v1267 = vunpack.c.l.b16 %v375
    %v1268 = vunpack.c.l.b16 %v376
    %v1269 = vunpack.c.l.b16 %v377
    %v1270 = vunpack.c.l.b16 %v378
    %v1271 = vunpack.c.l.b16 %v379
    %v1272 = vunpack.c.l.b16 %v380
    %v1273 = vunpack.c.l.b16 %v381
    %v1274 = vunpack.c.l.b16 %v382
    %v1275 = vunpack.c.l.b16 %v383
    %v1276 = vunpack.c.l.b16 %v384
    %v1277 = vunpack.c.l.b16 %v385
    %v1278 = vunpack.c.l.b16 %v386
    %v1279 = vunpack.c.l.b16 %v387
    %v1280 = vunpack.c.l.b16 %v388
    %v1281 = vunpack.c.l.b16 %v389
    %v1282 = vunpack.c.l.b16 %v390
    %v1283 = vunpack.c.l.b16 %v391
    %v1284 = vunpack.c.l.b16 %v392
    %v1285 = vunpack.c.l.b16 %v393
    %v1286 = vunpack.c.l.b16 %v394
    %v1287 = vunpack.c.l.b16 %v395
    %v1288 = vunpack.c.l.b16 %v396
    %v1289 = vunpack.c.l.b16 %v397
    %v1290 = vunpack.c.l.b16 %v398
    %v1291 = vunpack.c.l.b16 %v399
    %v1292 = vunpack.c.l.b16 %v400
    %v1293 = vunpack.c.l.b16 %v401
    %v1294 = vunpack.c.l.b16 %v402
    %v1295 = vunpack.c.l.b16 %v403
    %v1296 = vunpack.c.l.b16 %v404
    %v1297 = vunpack.c.l.b16 %v405
    %v1298 = vunpack.c.l.b16 %v406
    %v1299 = vunpack.c.l.b16 %v407
    %v1300 = vunpack.c.l.b16 %v408
    %v1301 = vunpack.c.l.b16 %v409
    %v1302 = vunpack.c.l.b16 %v410
    %v1303 = vunpack.c.l.b16 %v411
    %v1304 = vunpack.c.l.b16 %v412
    %v1305 = vunpack.c.l.b16 %v413
    %v1306 = vunpack.c.l.b16 %v414
    %v1307 = vunpack.c.l.b16 %v415
    %v1308 = vunpack.c.l.b16 %v416
    %v1309 = vunpack.c.l.b16 %v417
    %v1310 = vunpack.c.l.b16 %v418
    %v1311 = vunpack.c.l.b16 %v419
    %v1312 = vunpack.c.l.b16 %v420
    %v1313 = vunpack.c.l.b16 %v421
    %v1314 = vunpack.c.l.b16 %v422
    %v1315 = vunpack.c.l.b16 %v423
    %v1316 = vunpack.c.l.b16 %v424
    %v1317 = vunpack.c.l.b16 %v425
    %v1318 = vunpack.c.l.b16 %v426
    %v1319 = vunpack.c.l.b16 %v427
    %v1320 = vunpack.c.l.b16 %v428
    %v1321 = vunpack.c.l.b16 %v429
    %v1322 = vunpack.c.l.b16 %v430
    %v1323 = vunpack.c.l.b16 %v431
    %v1324 = vunpack.c.l.b16 %v432
    %v1325 = vunpack.c.l.b16 %v433
    %v1326 = vunpack.c.l.b16 %v434
    %v1327 = vunpack.c.l.b16 %v435
    %v1328 = vunpack.c.l.b16 %v436
    %v1329 = vunpack.c.l.b16 %v437
    %v1330 = vunpack.c.l.b16 %v438
    %v1331 = vunpack.c.l.b16 %v439
    %v1332 = vunpack.c.l.b16 %v440
    %v1333 = vunpack.c.l.b16 %v441
    %v1334 = vunpack.c.l.b16 %v442
    %v1335 = vunpack.c.l.b16 %v443
    %v1336 = vunpack.c.l.b16 %v444
    %v1337 = vunpack.c.l.b16 %v445
    %v1338 = vunpack.c.l.b16 %v446
    %v1339 = vunpack.c.l.b16 %v447
    %v1340 = vunpack.c.l.b16 %v448
    %v1341 = vunpack.c.l.b16 %v449
    %v1342 = vunpack.c.l.b16 %v450
    %v1343 = vunpack.c.l.b16 %v451
    %v1344 = vunpack.c.l.b16 %v452
    %v1345 = vunpack.c.l.b16 %v453
    %v1346 = vunpack.c.l.b16 %v454
    %v1347 = vunpack.c.l.b16 %v455
    %v1348 = vunpack.c.l.b16 %v456
    %v1349 = vunpack.c.l.b16 %v457
    %v1350 = vunpack.c.l.b16 %v458
    %v1351 = vunpack.c.l.b16 %v459
    %v1352 = vunpack.c.l.b16 %v460
    %v1353 = vunpack.c.l.b16 %v461
    %v1354 = vunpack.c.l.b16 %v462
    %v1355 = vunpack.c.l.b16 %v463
    %v1356 = vunpack.c.l.b16 %v464
    %v1357 = vunpack.c.l.b16 %v465
    %v1358 = vunpack.c.l.b16 %v466
    %v1359 = vunpack.c.l.b16 %v467
    %v1360 = vunpack.c.l.b16 %v468
    %v1361 = vunpack.c.l.b16 %v469
    %v1362 = vunpack.c.l.b16 %v470
    %v1363 = vunpack.c.l.b16 %v471
    %v1364 = vunpack.c.l.b16 %v472
    %v1365 = vunpack.c.l.b16 %v473
    %v1366 = vunpack.c.l.b16 %v474
    %v1367 = vunpack.c.l.b16 %v475
    %v1368 = vunpack.c.l.b16 %v476
    %v1369 = vunpack.c.l.b16 %v477
    %v1370 = vunpack.c.l.b16 %v478
    %v1371 = vunpack.c.l.b16 %v479
    %v1372 = vunpack.c.l.b16 %v480
    %v1373 = vunpack.c.l.b16 %v481
    %v1374 = vunpack.c.l.b16 %v482
    %v1375 = vunpack.c.l.b16 %v483
    %v1376 = vunpack.c.l.b16 %v484
    %v1377 = vunpack.c.l.b16 %v485
    %v1378 = vunpack.c.l.b16 %v486
    %v1379 = vunpack.c.l.b16 %v487
    %v1380 = vunpack.c.l.b16 %v488
    %v1381 = vunpack.c.l.b16 %v489
    %v1382 = vunpack.c.l.b16 %v490
    %v1383 = vunpack.c.l.b16 %v491
    %v1384 = vunpack.c.l.b16 %v492
    %v1385 = vunpack.c.l.b16 %v493
    %v1386 = vunpack.c.l.b16 %v494
    %v1387 = vunpack.c.l.b16 %v495
    %v1388 = vunpack.c.l.b16 %v496
    %v1389 = vunpack.c.l.b16 %v497
    %v1390 = vunpack.c.l.b16 %v498
    %v1391 = vunpack.c.l.b16 %v499
    %v1392 = vunpack.c.l.b16 %v500
    %v1393 = vunpack.c.l.b16 %v501
    %v1394 = vunpack.c.l.b16 %v502
    %v1395 = vunpack.c.l.b16 %v503
    %v1396 = vunpack.c.l.b16 %v504
    %v1397 = vunpack.c.l.b16 %v505
    %v1398 = vunpack.c.l.b16 %v506
    %v1399 = vunpack.c.l.b16 %v507
    %v1400 = vunpack.c.l.b16 %v508
    %v1401 = vunpack.c.l.b16 %v509
    %v1402 = vunpack.c.l.b16 %v510
    %v1403 = vunpack.c.l.b16 %v511
    %v1404 = vunpack.c.l.b16 %v512
    %v1405 = vunpack.c.l.b16 %v513
    %v1406 = vunpack.c.l.b16 %v514
    %v1407 = vunpack.c.l.b16 %v515
    %v1408 = vunpack.c.l.b16 %v516
    %v1409 = vunpack.c.l.b16 %v517
    %v1410 = vunpack.c.l.b16 %v518
    %v1411 = vunpack.c.l.b16 %v519
    %v1412 = vunpack.c.l.b16 %v520
    %v1413 = vunpack.c.l.b16 %v521
    %v1414 = vunpack.c.l.b16 %v522
    %v1415 = vunpack.c.l.b16 %v523
    %v1416 = vunpack.c.l.b16 %v524
    %v1417 = vunpack.c.l.b16 %v525
    %v1418 = vunpack.c.l.b16 %v526
    %v1419 = vunpack.c.l.b16 %v527
    %v1420 = vunpack.c.l.b16 %v528
    %v1421 = vunpack.c.l.b16 %v529
    %v1422 = vunpack.c.l.b16 %v530
    %v1423 = vunpack.c.l.b16 %v531
    %v1424 = vunpack.c.l.b16 %v532
    %v1425 = vunpack.c.l.b16 %v533
    %v1426 = vunpack.c.l.b16 %v534
    %v1427 = vunpack.c.l.b16 %v535
    %v1428 = vunpack.c.l.b16 %v536
    %v1429 = vunpack.c.l.b16 %v537
    %v1430 = vunpack.c.l.b16 %v538
    %v1431 = vunpack.c.l.b16 %v539
    %v1432 = vunpack.c.l.b16 %v540
    %v1433 = vunpack.c.l.b16 %v541
    %v1434 = vunpack.c.l.b16 %v542
    %v1435 = vunpack.c.l.b16 %v543
    %v1436 = vunpack.c.l.b16 %v544
    %v1437 = vunpack.c.l.b16 %v545
    %v1438 = vunpack.c.l.b16 %v546
    %v1439 = vunpack.c.l.b16 %v547
    %v1440 = vunpack.c.l.b16 %v548
    %v1441 = vunpack.c.l.b16 %v549
    %v1442 = vunpack.c.l.b16 %v550
    %v1443 = vunpack.c.l.b16 %v551
    %v1444 = vunpack.c.l.b16 %v552
    %v1445 = vunpack.c.l.b16 %v553
    %v1446 = vunpack.c.l.b16 %v554
    %v1447 = vunpack.c.l.b16 %v555
    %v1448 = vunpack.c.l.b16 %v556
    %v1449 = vunpack.c.l.b16 %v557
    %v1450 = vunpack.c.l.b16 %v558
    %v1451 = vunpack.c.l.b16 %v559
    %v1452 = vunpack.c.l.b16 %v560
    %v1453 = vunpack.c.l.b16 %v561
    %v1454 = vunpack.c.l.b16 %v562
    %v1455 = vunpack.c.l.b16 %v563
    %v1456 = vunpack.c.l.b16 %v564
    %v1457 = vunpack.c.l.b16 %v565
    %v1458 = vunpack.c.l.b16 %v566
    %v1459 = vunpack.c.l.b16 %v567
    %v1460 = vunpack.c.l.b16 %v568
    %v1461 = vunpack.c.l.b16 %v569
    %v1462 = vunpack.c.l.b16 %v570
    %v1463 = vunpack.c.l.b16 %v571
    %v1464 = vunpack.c.l.b16 %v572
    %v1465 = vunpack.c.l.b16 %v573
    %v1466 = vunpack.c.l.b16 %v574
    %v1467 = vunpack.c.l.b16 %v575
    %v1468 = vunpack.c.l.b16 %v576
    %v1469 = vunpack.c.l.b16 %v577
    %v1470 = vunpack.c.l.b16 %v578
    %v1471 = vunpack.c.l.b16 %v579
    %v1472 = vunpack.c.l.b16 %v580
    %v1473 = vunpack.c.l.b16 %v581
    %v1474 = vunpack.c.l.b16 %v582
    %v1475 = vunpack.c.l.b16 %v583
    %v1476 = vunpack.c.l.b16 %v584
    %v1477 = vunpack.c.l.b16 %v585
    %v1478 = vunpack.c.l.b16 %v586
    %v1479 = vunpack.c.l.b16 %v587
    %v1480 = vunpack.c.l.b16 %v588
    %v1481 = vunpack.c.l.b16 %v589
    %v1482 = vunpack.c.l.b16 %v590
    %v1483 = vunpack.c.l.b16 %v591
    %v1484 = vunpack.c.l.b16 %v592
    %v1485 = vunpack.c.l.b16 %v593
    %v1486 = vunpack.c.l.b16 %v594
    %v1487 = vunpack.c.l.b16 %v595
    %v1488 = vunpack.c.l.b16 %v596
    %v1489 = vunpack.c.l.b16 %v597
    %v1490 = vunpack.c.l.b16 %v598
    %v1491 = vunpack.c.l.b16 %v599
    %v1492 = vunpack.c.l.b16 %v600
    %v1493 = vunpack.c.l.b16 %v601
    %v1494 = vunpack.c.l.b16 %v602
    %v1495 = vunpack.c.l.b16 %v603
    %v1496 = vunpack.c.l.b16 %v604
    %v1497 = vunpack.c.l.b16 %v605
    %v1498 = vunpack.c.l.b16 %v606
    %v1499 = vpack.c.b16 %v1100, %v1099
    %v1500 = vpack.c.b16 %v1102, %v1101
    %v1501 = vpack.c.b16 %v1104, %v1103
    %v1502 = vpack.c.b16 %v1106, %v1105
    %v1503 = vpack.c.b16 %v1108, %v1107
    %v1504 = vpack.c.b16 %v1110, %v1109
    %v1505 = vpack.c.b16 %v1112, %v1111
    %v1506 = vpack.c.b16 %v1114, %v1113
    %v1507 = vpack.c.b16 %v1116, %v1115
    %v1508 = vpack.c.b16 %v1118, %v1117
    %v1509 = vpack.c.b16 %v1120, %v1119
    %v1510 = vpack.c.b16 %v1122, %v1121
    %v1511 = vpack.c.b16 %v1124, %v1123
    %v1512 = vpack.c.b16 %v1126, %v1125
    %v1513 = vpack.c.b16 %v1128, %v1127
    %v1514 = vpack.c.b16 %v1130, %v1129
    %v1515 = vpack.c.b16 %v1132, %v1131
    %v1516 = vpack.c.b16 %v1134, %v1133
    %v1517 = vpack.c.b16 %v1136, %v1135
    %v1518 = vpack.c.b16 %v1138, %v1137
    %v1519 = vpack.c.b16 %v1140, %v1139
    %v1520 = vpack.c.b16 %v1142, %v1141
    %v1521 = vpack.c.b16 %v1144, %v1143
    %v1522 = vpack.c.b16 %v1146, %v1145
    %v1523 = vpack.c.b16 %v1148, %v1147
    %v1524 = vpack.c.b16 %v1150, %v1149
    %v1525 = vpack.c.b16 %v1152, %v1151
    %v1526 = vpack.c.b16 %v1154, %v1153
    %v1527 = vpack.c.b16 %v1156, %v1155
    %v1528 = vpack.c.b16 %v1158, %v1157
    %v1529 = vpack.c.b16 %v1160, %v1159
    %v1530 = vpack.c.b16 %v1162, %v1161
    %v1531 = vpack.c.b16 %v1164, %v1163
    %v1532 = vpack.c.b16 %v1166, %v1165
    %v1533 = vpack.c.b16 %v1168, %v1167
    %v1534 = vpack.c.b16 %v1170, %v1169
    %v1535 = vpack.c.b16 %v1172, %v1171
    %v1536 = vpack.c.b16 %v1174, %v1173
    %v1537 = vpack.c.b16 %v1176, %v1175
    %v1538 = vpack.c.b16 %v1178, %v1177
    %v1539 = vpack.c.b16 %v1180, %v1179
    %v1540 = vpack.c.b16 %v1182, %v1181
    %v1541 = vpack.c.b16 %v1184, %v1183
    %v1542 = vpack.c.b16 %v1186, %v1185
    %v1543 = vpack.c.b16 %v1188, %v1187
    %v1544 = vpack.c.b16 %v1190, %v1189
    %v1545 = vpack.c.b16 %v1192, %v1191
    %v1546 = vpack.c.b16 %v1194, %v1193
    %v1547 = vpack.c.b16 %v1196, %v1195
    %v1548 = vpack.c.b16 %v1198, %v1197
    %v1549 = vpack.c.b16 %v1200, %v1199
    %v1550 = vpack.c.b16 %v1202, %v1201
    %v1551 = vpack.c.b16 %v1204, %v1203
    %v1552 = vpack.c.b16 %v1206, %v1205
    %v1553 = vpack.c.b16 %v1208, %v1207
    %v1554 = vpack.c.b16 %v1210, %v1209
    %v1555 = vpack.c.b16 %v1212, %v1211
    %v1556 = vpack.c.b16 %v1214, %v1213
    %v1557 = vpack.c.b16 %v1216, %v1215
    %v1558 = vpack.c.b16 %v1218, %v1217
    %v1559 = vpack.c.b16 %v1220, %v1219
    %v1560 = vpack.c.b16 %v1222, %v1221
    %v1561 = vpack.c.b16 %v1224, %v1223
    %v1562 = vpack.c.b16 %v1226, %v1225
    %v1563 = vpack.c.b16 %v1228, %v1227
    %v1564 = vpack.c.b16 %v1230, %v1229
    %v1565 = vpack.c.b16 %v1232, %v1231
    %v1566 = vpack.c.b16 %v1234, %v1233
    %v1567 = vpack.c.b16 %v1236, %v1235
    %v1568 = vpack.c.b16 %v1238, %v1237
    %v1569 = vpack.c.b16 %v1240, %v1239
    %v1570 = vpack.c.b16 %v1242, %v1241
    %v1571 = vpack.c.b16 %v1244, %v1243
    %v1572 = vpack.c.b16 %v1246, %v1245
    %v1573 = vpack.c.b16 %v1248, %v1247
    %v1574 = vpack.c.b16 %v1250, %v1249
    %v1575 = vpack.c.b16 %v1252, %v1251
    %v1576 = vpack.c.b16 %v1254, %v1253
    %v1577 = vpack.c.b16 %v1256, %v1255
    %v1578 = vpack.c.b16 %v1258, %v1257
    %v1579 = vpack.c.b16 %v1260, %v1259
    %v1580 = vpack.c.b16 %v1262, %v1261
    %v1581 = vpack.c.b16 %v1264, %v1263
    %v1582 = vpack.c.b16 %v1266, %v1265
    %v1583 = vpack.c.b16 %v1268, %v1267
    %v1584 = vpack.c.b16 %v1270, %v1269
    %v1585 = vpack.c.b16 %v1272, %v1271
    %v1586 = vpack.c.b16 %v1274, %v1273
    %v1587 = vpack.c.b16 %v1276, %v1275
    %v1588 = vpack.c.b16 %v1278, %v1277
    %v1589 = vpack.c.b16 %v1280, %v1279
    %v1590 = vpack.c.b16 %v1282, %v1281
    %v1591 = vpack.c.b16 %v1284, %v1283
    %v1592 = vpack.c.b16 %v1286, %v1285
    %v1593 = vpack.c.b16 %v1288, %v1287
    %v1594 = vpack.c.b16 %v1290, %v1289
    %v1595 = vpack.c.b16 %v1292, %v1291
    %v1596 = vpack.c.b16 %v1294, %v1293
    %v1597 = vpack.c.b16 %v1296, %v1295
    %v1598 = vpack.c.b16 %v1298, %v1297
    %v1599 = vpack.c.b16 %v1300, %v1299
    %v1600 = vpack.c.b16 %v1302, %v1301
    %v1601 = vpack.c.b16 %v1304, %v1303
    %v1602 = vpack.c.b16 %v1306, %v1305
    %v1603 = vpack.c.b16 %v1308, %v1307
    %v1604 = vpack.c.b16 %v1310, %v1309
    %v1605 = vpack.c.b16 %v1312, %v1311
    %v1606 = vpack.c.b16 %v1314, %v1313
    %v1607 = vpack.c.b16 %v1316, %v1315
    %v1608 = vpack.c.b16 %v1318, %v1317
    %v1609 = vpack.c.b16 %v1320, %v1319
    %v1610 = vpack.c.b16 %v1322, %v1321
    %v1611 = vpack.c.b16 %v1324, %v1323
    %v1612 = vpack.c.b16 %v1326, %v1325
    %v1613 = vpack.c.b16 %v1328, %v1327
    %v1614 = vpack.c.b16 %v1330, %v1329
    %v1615 = vpack.c.b16 %v1332, %v1331
    %v1616 = vpack.c.b16 %v1334, %v1333
    %v1617 = vpack.c.b16 %v1336, %v1335
    %v1618 = vpack.c.b16 %v1338, %v1337
    %v1619 = vpack.c.b16 %v1340, %v1339
    %v1620 = vpack.c.b16 %v1342, %v1341
    %v1621 = vpack.c.b16 %v1344, %v1343
    %v1622 = vpack.c.b16 %v1346, %v1345
    %v1623 = vpack.c.b16 %v1348, %v1347
    %v1624 = vpack.c.b16 %v1350, %v1349
    %v1625 = vpack.c.b16 %v1352, %v1351
    %v1626 = vpack.c.b16 %v1354, %v1353
    %v1627 = vpack.c.b16 %v1356, %v1355
    %v1628 = vpack.c.b16 %v1358, %v1357
    %v1629 = vpack.c.b16 %v1360, %v1359
    %v1630 = vpack.c.b16 %v1362, %v1361
    %v1631 = vpack.c.b16 %v1364, %v1363
    %v1632 = vpack.c.b16 %v1366, %v1365
    %v1633 = vpack.c.b16 %v1368, %v1367
    %v1634 = vpack.c.b16 %v1370, %v1369
    %v1635 = vpack.c.b16 %v1372, %v1371
    %v1636 = vpack.c.b16 %v1374, %v1373
    %v1637 = vpack.c.b16 %v1376, %v1375
    %v1638 = vpack.c.b16 %v1378, %v1377
    %v1639 = vpack.c.b16 %v1380, %v1379
    %v1640 = vpack.c.b16 %v1382, %v1381
    %v1641 = vpack.c.b16 %v1384, %v1383
    %v1642 = vpack.c.b16 %v1386, %v1385
    %v1643 = vpack.c.b16 %v1388, %v1387
    %v1644 = vpack.c.b16 %v1390, %v1389
    %v1645 = vpack.c.b16 %v1392, %v1391
    %v1646 = vpack.c.b16 %v1394, %v1393
    %v1647 = vpack.c.b16 %v1396, %v1395
    %v1648 = vpack.c.b16 %v1398, %v1397
    %v1649 = vpack.c.b16 %v1400, %v1399
    %v1650 = vpack.c.b16 %v1402, %v1401
    %v1651 = vpack.c.b16 %v1404, %v1403
    %v1652 = vpack.c.b16 %v1406, %v1405
    %v1653 = vpack.c.b16 %v1408, %v1407
    %v1654 = vpack.c.b16 %v1410, %v1409
    %v1655 = vpack.c.b16 %v1412, %v1411
    %v1656 = vpack.c.b16 %v1414, %v1413
    %v1657 = vpack.c.b16 %v1416, %v1415
    %v1658 = vpack.c.b16 %v1418, %v1417
    %v1659 = vpack.c.b16 %v1420, %v1419
    %v1660 = vpack.c.b16 %v1422, %v1421
    %v1661 = vpack.c.b16 %v1424, %v1423
    %v1662 = vpack.c.b16 %v1426, %v1425
    %v1663 = vpack.c.b16 %v1428, %v1427
    %v1664 = vpack.c.b16 %v1430, %v1429
    %v1665 = vpack.c.b16 %v1432, %v1431
    %v1666 = vpack.c.b16 %v1434, %v1433
    %v1667 = vpack.c.b16 %v1436, %v1435
    %v1668 = vpack.c.b16 %v1438, %v1437
    %v1669 = vpack.c.b16 %v1440, %v1439
    %v1670 = vpack.c.b16 %v1442, %v1441
    %v1671 = vpack.c.b16 %v1444, %v1443
    %v1672 = vpack.c.b16 %v1446, %v1445
    %v1673 = vpack.c.b16 %v1448, %v1447
    %v1674 = vpack.c.b16 %v1450, %v1449
    %v1675 = vpack.c.b16 %v1452, %v1451
    %v1676 = vpack.c.b16 %v1454, %v1453
    %v1677 = vpack.c.b16 %v1456, %v1455
    %v1678 = vpack.c.b16 %v1458, %v1457
    %v1679 = vpack.c.b16 %v1460, %v1459
    %v1680 = vpack.c.b16 %v1462, %v1461
    %v1681 = vpack.c.b16 %v1464, %v1463
    %v1682 = vpack.c.b16 %v1466, %v1465
    %v1683 = vpack.c.b16 %v1468, %v1467
    %v1684 = vpack.c.b16 %v1470, %v1469
    %v1685 = vpack.c.b16 %v1472, %v1471
    %v1686 = vpack.c.b16 %v1474, %v1473
    %v1687 = vpack.c.b16 %v1476, %v1475
    %v1688 = vpack.c.b16 %v1478, %v1477
    %v1689 = vpack.c.b16 %v1480, %v1479
    %v1690 = vpack.c.b16 %v1482, %v1481
    %v1691 = vpack.c.b16 %v1484, %v1483
    %v1692 = vpack.c.b16 %v1486, %v1485
    %v1693 = vpack.c.b16 %v1488, %v1487
    %v1694 = vpack.c.b16 %v1490, %v1489
    %v1695 = vpack.c.b16 %v1492, %v1491
    %v1696 = vpack.c.b16 %v1494, %v1493
    %v1697 = vpack.c.b16 %v1496, %v1495
    %v1698 = vpack.c.b16 %v1498, %v1497
    %1899 = vmatpush.bf16.msra.mxu0 %v1506
    %1900 = vmatpush.bf16.msra.mxu0 %v1505
    %1901 = vmatpush.bf16.msra.mxu0 %v1504
    %1902 = vmatpush.bf16.msra.mxu0 %v1503
    %1903 = vmatpush.bf16.msra.mxu0 %v1502
    %1904 = vmatpush.bf16.msra.mxu0 %v1501
    %1905 = vmatpush.bf16.msra.mxu0 %v1500
    %1906 = vmatpush.bf16.msra.mxu0 %v1499
    %1907 = vmatmul.bf16.gmra.mxu0 %v649
    %v1908 = vpop.f32.mrf.mxu0
    %v1909 = vadd.f32 %v609, %v1908
    %v1910 = vpop.f32.mrf.mxu0
    %1911 = vdwg.mxu0
    %1912 = vmatpush.bf16.msra.mxu0 %v1514
    %1913 = vmatpush.bf16.msra.mxu0 %v1513
    %1914 = vmatpush.bf16.msra.mxu0 %v1512
    %1915 = vmatpush.bf16.msra.mxu0 %v1511
    %1916 = vmatpush.bf16.msra.mxu0 %v1510
    %1917 = vmatpush.bf16.msra.mxu0 %v1509
    %1918 = vmatpush.bf16.msra.mxu0 %v1508
    %1919 = vmatpush.bf16.msra.mxu0 %v1507
    %1920 = vmatmul.bf16.gmra.mxu0 %v650
    %v1921 = vpop.f32.mrf.mxu0
    %v1922 = vadd.f32 %v1909, %v1921
    %v1923 = vpop.f32.mrf.mxu0
    %1924 = vdwg.mxu0
    %1925 = vmatpush.bf16.msra.mxu0 %v1522
    %1926 = vmatpush.bf16.msra.mxu0 %v1521
    %1927 = vmatpush.bf16.msra.mxu0 %v1520
    %1928 = vmatpush.bf16.msra.mxu0 %v1519
    %1929 = vmatpush.bf16.msra.mxu0 %v1518
    %1930 = vmatpush.bf16.msra.mxu0 %v1517
    %1931 = vmatpush.bf16.msra.mxu0 %v1516
    %1932 = vmatpush.bf16.msra.mxu0 %v1515
    %1933 = vmatmul.bf16.gmra.mxu0 %v651
    %v1934 = vpop.f32.mrf.mxu0
    %v1935 = vadd.f32 %v1922, %v1934
    %v1936 = vpop.f32.mrf.mxu0
    %1937 = vdwg.mxu0
    %1938 = vmatpush.bf16.msra.mxu0 %v1530
    %1939 = vmatpush.bf16.msra.mxu0 %v1529
    %1940 = vmatpush.bf16.msra.mxu0 %v1528
    %1941 = vmatpush.bf16.msra.mxu0 %v1527
    %1942 = vmatpush.bf16.msra.mxu0 %v1526
    %1943 = vmatpush.bf16.msra.mxu0 %v1525
    %1944 = vmatpush.bf16.msra.mxu0 %v1524
    %1945 = vmatpush.bf16.msra.mxu0 %v1523
    %1946 = vmatmul.bf16.gmra.mxu0 %v652
    %v1947 = vpop.f32.mrf.mxu0
    %v1948 = vadd.f32 %v1935, %v1947
    %v1949 = vpop.f32.mrf.mxu0
    %1950 = vdwg.mxu0
    %1951 = vmatpush.bf16.msra.mxu0 %v1538
    %1952 = vmatpush.bf16.msra.mxu0 %v1537
    %1953 = vmatpush.bf16.msra.mxu0 %v1536
    %1954 = vmatpush.bf16.msra.mxu0 %v1535
    %1955 = vmatpush.bf16.msra.mxu0 %v1534
    %1956 = vmatpush.bf16.msra.mxu0 %v1533
    %1957 = vmatpush.bf16.msra.mxu0 %v1532
    %1958 = vmatpush.bf16.msra.mxu0 %v1531
    %1959 = vmatmul.bf16.gmra.mxu0 %v653
    %v1960 = vpop.f32.mrf.mxu0
    %v1961 = vadd.f32 %v1948, %v1960
    %v1962 = vpop.f32.mrf.mxu0
    %1963 = vdwg.mxu0
    %1964 = vmatpush.bf16.msra.mxu0 %v1546
    %1965 = vmatpush.bf16.msra.mxu0 %v1545
    %1966 = vmatpush.bf16.msra.mxu0 %v1544
    %1967 = vmatpush.bf16.msra.mxu0 %v1543
    %1968 = vmatpush.bf16.msra.mxu0 %v1542
    %1969 = vmatpush.bf16.msra.mxu0 %v1541
    %1970 = vmatpush.bf16.msra.mxu0 %v1540
    %1971 = vmatpush.bf16.msra.mxu0 %v1539
    %1972 = vmatmul.bf16.gmra.mxu0 %v654
    %v1973 = vpop.f32.mrf.mxu0
    %v1974 = vadd.f32 %v1961, %v1973
    %v1975 = vpop.f32.mrf.mxu0
    %1976 = vdwg.mxu0
    %1977 = vmatpush.bf16.msra.mxu0 %v1554
    %1978 = vmatpush.bf16.msra.mxu0 %v1553
    %1979 = vmatpush.bf16.msra.mxu0 %v1552
    %1980 = vmatpush.bf16.msra.mxu0 %v1551
    %1981 = vmatpush.bf16.msra.mxu0 %v1550
    %1982 = vmatpush.bf16.msra.mxu0 %v1549
    %1983 = vmatpush.bf16.msra.mxu0 %v1548
    %1984 = vmatpush.bf16.msra.mxu0 %v1547
    %1985 = vmatmul.bf16.gmra.mxu0 %v655
    %v1986 = vpop.f32.mrf.mxu0
    %v1987 = vadd.f32 %v1974, %v1986
    %v1988 = vpop.f32.mrf.mxu0
    %1989 = vdwg.mxu0
    %1990 = vmatpush.bf16.msra.mxu0 %v1562
    %1991 = vmatpush.bf16.msra.mxu0 %v1561
    %1992 = vmatpush.bf16.msra.mxu0 %v1560
    %1993 = vmatpush.bf16.msra.mxu0 %v1559
    %1994 = vmatpush.bf16.msra.mxu0 %v1558
    %1995 = vmatpush.bf16.msra.mxu0 %v1557
    %1996 = vmatpush.bf16.msra.mxu0 %v1556
    %1997 = vmatpush.bf16.msra.mxu0 %v1555
    %1998 = vmatmul.bf16.gmra.mxu0 %v656
    %v1999 = vpop.f32.mrf.mxu0
    %v2000 = vadd.f32 %v1987, %v1999
    %v2001 = vpop.f32.mrf.mxu0
    %2002 = vdwg.mxu0
    %2003 = vmatpush.bf16.msra.mxu0 %v1570
    %2004 = vmatpush.bf16.msra.mxu0 %v1569
    %2005 = vmatpush.bf16.msra.mxu0 %v1568
    %2006 = vmatpush.bf16.msra.mxu0 %v1567
    %2007 = vmatpush.bf16.msra.mxu0 %v1566
    %2008 = vmatpush.bf16.msra.mxu0 %v1565
    %2009 = vmatpush.bf16.msra.mxu0 %v1564
    %2010 = vmatpush.bf16.msra.mxu0 %v1563
    %2011 = vmatmul.bf16.gmra.mxu0 %v657
    %v2012 = vpop.f32.mrf.mxu0
    %v2013 = vadd.f32 %v2000, %v2012
    %v2014 = vpop.f32.mrf.mxu0
    %2015 = vdwg.mxu0
    %2016 = vmatpush.bf16.msra.mxu0 %v1578
    %2017 = vmatpush.bf16.msra.mxu0 %v1577
    %2018 = vmatpush.bf16.msra.mxu0 %v1576
    %2019 = vmatpush.bf16.msra.mxu0 %v1575
    %2020 = vmatpush.bf16.msra.mxu0 %v1574
    %2021 = vmatpush.bf16.msra.mxu0 %v1573
    %2022 = vmatpush.bf16.msra.mxu0 %v1572
    %2023 = vmatpush.bf16.msra.mxu0 %v1571
    %2024 = vmatmul.bf16.gmra.mxu0 %v658
    %v2025 = vpop.f32.mrf.mxu0
    %v2026 = vadd.f32 %v2013, %v2025
    %v2027 = vpop.f32.mrf.mxu0
    %2028 = vdwg.mxu0
    %2029 = vmatpush.bf16.msra.mxu0 %v1586
    %2030 = vmatpush.bf16.msra.mxu0 %v1585
    %2031 = vmatpush.bf16.msra.mxu0 %v1584
    %2032 = vmatpush.bf16.msra.mxu0 %v1583
    %2033 = vmatpush.bf16.msra.mxu0 %v1582
    %2034 = vmatpush.bf16.msra.mxu0 %v1581
    %2035 = vmatpush.bf16.msra.mxu0 %v1580
    %2036 = vmatpush.bf16.msra.mxu0 %v1579
    %2037 = vmatmul.bf16.gmra.mxu0 %v659
    %v2038 = vpop.f32.mrf.mxu0
    %v2039 = vadd.f32 %v2026, %v2038
    %v2040 = vpop.f32.mrf.mxu0
    %2041 = vdwg.mxu0
    %2042 = vmatpush.bf16.msra.mxu0 %v1594
    %2043 = vmatpush.bf16.msra.mxu0 %v1593
    %2044 = vmatpush.bf16.msra.mxu0 %v1592
    %2045 = vmatpush.bf16.msra.mxu0 %v1591
    %2046 = vmatpush.bf16.msra.mxu0 %v1590
    %2047 = vmatpush.bf16.msra.mxu0 %v1589
    %2048 = vmatpush.bf16.msra.mxu0 %v1588
    %2049 = vmatpush.bf16.msra.mxu0 %v1587
    %2050 = vmatmul.bf16.gmra.mxu0 %v660
    %v2051 = vpop.f32.mrf.mxu0
    %v2052 = vadd.f32 %v2039, %v2051
    %v2053 = vpop.f32.mrf.mxu0
    %2054 = vdwg.mxu0
    %2055 = vmatpush.bf16.msra.mxu0 %v1602
    %2056 = vmatpush.bf16.msra.mxu0 %v1601
    %2057 = vmatpush.bf16.msra.mxu0 %v1600
    %2058 = vmatpush.bf16.msra.mxu0 %v1599
    %2059 = vmatpush.bf16.msra.mxu0 %v1598
    %2060 = vmatpush.bf16.msra.mxu0 %v1597
    %2061 = vmatpush.bf16.msra.mxu0 %v1596
    %2062 = vmatpush.bf16.msra.mxu0 %v1595
    %2063 = vmatmul.bf16.gmra.mxu0 %v661
    %v2064 = vpop.f32.mrf.mxu0
    %v2065 = vadd.f32 %v2052, %v2064
    %v2066 = vpop.f32.mrf.mxu0
    %2067 = vdwg.mxu0
    %2068 = vmatpush.bf16.msra.mxu0 %v1610
    %2069 = vmatpush.bf16.msra.mxu0 %v1609
    %2070 = vmatpush.bf16.msra.mxu0 %v1608
    %2071 = vmatpush.bf16.msra.mxu0 %v1607
    %2072 = vmatpush.bf16.msra.mxu0 %v1606
    %2073 = vmatpush.bf16.msra.mxu0 %v1605
    %2074 = vmatpush.bf16.msra.mxu0 %v1604
    %2075 = vmatpush.bf16.msra.mxu0 %v1603
    %2076 = vmatmul.bf16.gmra.mxu0 %v662
    %v2077 = vpop.f32.mrf.mxu0
    %v2078 = vadd.f32 %v2065, %v2077
    %v2079 = vpop.f32.mrf.mxu0
    %2080 = vdwg.mxu0
    %2081 = vmatpush.bf16.msra.mxu0 %v1618
    %2082 = vmatpush.bf16.msra.mxu0 %v1617
    %2083 = vmatpush.bf16.msra.mxu0 %v1616
    %2084 = vmatpush.bf16.msra.mxu0 %v1615
    %2085 = vmatpush.bf16.msra.mxu0 %v1614
    %2086 = vmatpush.bf16.msra.mxu0 %v1613
    %2087 = vmatpush.bf16.msra.mxu0 %v1612
    %2088 = vmatpush.bf16.msra.mxu0 %v1611
    %2089 = vmatmul.bf16.gmra.mxu0 %v663
    %v2090 = vpop.f32.mrf.mxu0
    %v2091 = vadd.f32 %v2078, %v2090
    %v2092 = vpop.f32.mrf.mxu0
    %2093 = vdwg.mxu0
    %2094 = vmatpush.bf16.msra.mxu0 %v1626
    %2095 = vmatpush.bf16.msra.mxu0 %v1625
    %2096 = vmatpush.bf16.msra.mxu0 %v1624
    %2097 = vmatpush.bf16.msra.mxu0 %v1623
    %2098 = vmatpush.bf16.msra.mxu0 %v1622
    %2099 = vmatpush.bf16.msra.mxu0 %v1621
    %2100 = vmatpush.bf16.msra.mxu0 %v1620
    %2101 = vmatpush.bf16.msra.mxu0 %v1619
    %2102 = vmatmul.bf16.gmra.mxu0 %v664
    %v2103 = vpop.f32.mrf.mxu0
    %v2104 = vadd.f32 %v2091, %v2103
    %v2105 = vpop.f32.mrf.mxu0
    %2106 = vdwg.mxu0
    %2107 = vmatpush.bf16.msra.mxu0 %v1634
    %2108 = vmatpush.bf16.msra.mxu0 %v1633
    %2109 = vmatpush.bf16.msra.mxu0 %v1632
    %2110 = vmatpush.bf16.msra.mxu0 %v1631
    %2111 = vmatpush.bf16.msra.mxu0 %v1630
    %2112 = vmatpush.bf16.msra.mxu0 %v1629
    %2113 = vmatpush.bf16.msra.mxu0 %v1628
    %2114 = vmatpush.bf16.msra.mxu0 %v1627
    %2115 = vmatmul.bf16.gmra.mxu0 %v665
    %v2116 = vpop.f32.mrf.mxu0
    %v2117 = vadd.f32 %v2104, %v2116
    %v2118 = vpop.f32.mrf.mxu0
    %2119 = vdwg.mxu0
    %2120 = vmatpush.bf16.msra.mxu0 %v1642
    %2121 = vmatpush.bf16.msra.mxu0 %v1641
    %2122 = vmatpush.bf16.msra.mxu0 %v1640
    %2123 = vmatpush.bf16.msra.mxu0 %v1639
    %2124 = vmatpush.bf16.msra.mxu0 %v1638
    %2125 = vmatpush.bf16.msra.mxu0 %v1637
    %2126 = vmatpush.bf16.msra.mxu0 %v1636
    %2127 = vmatpush.bf16.msra.mxu0 %v1635
    %2128 = vmatmul.bf16.gmra.mxu0 %v666
    %v2129 = vpop.f32.mrf.mxu0
    %v2130 = vadd.f32 %v2117, %v2129
    %v2131 = vpop.f32.mrf.mxu0
    %2132 = vdwg.mxu0
    %2133 = vmatpush.bf16.msra.mxu0 %v1650
    %2134 = vmatpush.bf16.msra.mxu0 %v1649
    %2135 = vmatpush.bf16.msra.mxu0 %v1648
    %2136 = vmatpush.bf16.msra.mxu0 %v1647
    %2137 = vmatpush.bf16.msra.mxu0 %v1646
    %2138 = vmatpush.bf16.msra.mxu0 %v1645
    %2139 = vmatpush.bf16.msra.mxu0 %v1644
    %2140 = vmatpush.bf16.msra.mxu0 %v1643
    %2141 = vmatmul.bf16.gmra.mxu0 %v667
    %v2142 = vpop.f32.mrf.mxu0
    %v2143 = vadd.f32 %v2130, %v2142
    %v2144 = vpop.f32.mrf.mxu0
    %2145 = vdwg.mxu0
    %2146 = vmatpush.bf16.msra.mxu0 %v1658
    %2147 = vmatpush.bf16.msra.mxu0 %v1657
    %2148 = vmatpush.bf16.msra.mxu0 %v1656
    %2149 = vmatpush.bf16.msra.mxu0 %v1655
    %2150 = vmatpush.bf16.msra.mxu0 %v1654
    %2151 = vmatpush.bf16.msra.mxu0 %v1653
    %2152 = vmatpush.bf16.msra.mxu0 %v1652
    %2153 = vmatpush.bf16.msra.mxu0 %v1651
    %2154 = vmatmul.bf16.gmra.mxu0 %v668
    %v2155 = vpop.f32.mrf.mxu0
    %v2156 = vadd.f32 %v2143, %v2155
    %v2157 = vpop.f32.mrf.mxu0
    %2158 = vdwg.mxu0
    %2159 = vmatpush.bf16.msra.mxu0 %v1666
    %2160 = vmatpush.bf16.msra.mxu0 %v1665
    %2161 = vmatpush.bf16.msra.mxu0 %v1664
    %2162 = vmatpush.bf16.msra.mxu0 %v1663
    %2163 = vmatpush.bf16.msra.mxu0 %v1662
    %2164 = vmatpush.bf16.msra.mxu0 %v1661
    %2165 = vmatpush.bf16.msra.mxu0 %v1660
    %2166 = vmatpush.bf16.msra.mxu0 %v1659
    %2167 = vmatmul.bf16.gmra.mxu0 %v669
    %v2168 = vpop.f32.mrf.mxu0
    %v2169 = vadd.f32 %v2156, %v2168
    %v2170 = vpop.f32.mrf.mxu0
    %2171 = vdwg.mxu0
    %2172 = vmatpush.bf16.msra.mxu0 %v1674
    %2173 = vmatpush.bf16.msra.mxu0 %v1673
    %2174 = vmatpush.bf16.msra.mxu0 %v1672
    %2175 = vmatpush.bf16.msra.mxu0 %v1671
    %2176 = vmatpush.bf16.msra.mxu0 %v1670
    %2177 = vmatpush.bf16.msra.mxu0 %v1669
    %2178 = vmatpush.bf16.msra.mxu0 %v1668
    %2179 = vmatpush.bf16.msra.mxu0 %v1667
    %2180 = vmatmul.bf16.gmra.mxu0 %v670
    %v2181 = vpop.f32.mrf.mxu0
    %v2182 = vadd.f32 %v2169, %v2181
    %v2183 = vpop.f32.mrf.mxu0
    %2184 = vdwg.mxu0
    %2185 = vmatpush.bf16.msra.mxu0 %v1682
    %2186 = vmatpush.bf16.msra.mxu0 %v1681
    %2187 = vmatpush.bf16.msra.mxu0 %v1680
    %2188 = vmatpush.bf16.msra.mxu0 %v1679
    %2189 = vmatpush.bf16.msra.mxu0 %v1678
    %2190 = vmatpush.bf16.msra.mxu0 %v1677
    %2191 = vmatpush.bf16.msra.mxu0 %v1676
    %2192 = vmatpush.bf16.msra.mxu0 %v1675
    %2193 = vmatmul.bf16.gmra.mxu0 %v671
    %v2194 = vpop.f32.mrf.mxu0
    %v2195 = vadd.f32 %v2182, %v2194
    %v2196 = vpop.f32.mrf.mxu0
    %2197 = vdwg.mxu0
    %2198 = vmatpush.bf16.msra.mxu0 %v1690
    %2199 = vmatpush.bf16.msra.mxu0 %v1689
    %2200 = vmatpush.bf16.msra.mxu0 %v1688
    %2201 = vmatpush.bf16.msra.mxu0 %v1687
    %2202 = vmatpush.bf16.msra.mxu0 %v1686
    %2203 = vmatpush.bf16.msra.mxu0 %v1685
    %2204 = vmatpush.bf16.msra.mxu0 %v1684
    %2205 = vmatpush.bf16.msra.mxu0 %v1683
    %2206 = vmatmul.bf16.gmra.mxu0 %v672
    %v2207 = vpop.f32.mrf.mxu0
    %v2208 = vadd.f32 %v2195, %v2207
    %v2209 = vpop.f32.mrf.mxu0
    %2210 = vdwg.mxu0
    %2211 = vmatpush.bf16.msra.mxu0 %v1698
    %2212 = vmatpush.bf16.msra.mxu0 %v1697
    %2213 = vmatpush.bf16.msra.mxu0 %v1696
    %2214 = vmatpush.bf16.msra.mxu0 %v1695
    %2215 = vmatpush.bf16.msra.mxu0 %v1694
    %2216 = vmatpush.bf16.msra.mxu0 %v1693
    %2217 = vmatpush.bf16.msra.mxu0 %v1692
    %2218 = vmatpush.bf16.msra.mxu0 %v1691
    %2219 = vmatmul.bf16.gmra.mxu0 %v673
    %v2220 = vpop.f32.mrf.mxu0
    %v2221 = vadd.f32 %v2208, %v2220
    %v2222 = vpop.f32.mrf.mxu0
    %2223 = vdwg.mxu0
    %vm2224 = vcmp.ge.f32.partialorder %v2221, 0.0
    %v2225 = vmul.f32 %v2221, 0.01
    %v2226 = vsel %vm2224, %v2221, %v2225
    %v2227 = vld [vmem:[%s4] sm:$0x1]
    %v2228 = vld [vmem:[#allocation9] sm:$0x1]
    %s2229 = sld [smem:[#allocation2]]
    %s2230 = sld [smem:[#allocation2 + $0x1]]
    %s2231 = sld [smem:[#allocation2 + $0x2]]
    %s2232 = sld [smem:[#allocation2 + $0x3]]
    %2233 = vadd.xlane.f32.xlu0 %v2226
    %v2234 = vpop.xlane.xlu0 %2233
    %v2235 = vmul.f32 %v2234, 0.01
    %v2236 = vsub.f32 %v2226, %v2235
    %v2237 = vmul.f32 %v2236, %v193
    %v2238 = vmul.f32 %v2237, %v2237
    %2239 = vadd.xlane.f32.xlu0 %v2238
    %v2240 = vpop.xlane.xlu0 %2239
    %v2241 = vmul.f32 %v2240, 0.01010101
    %v2242 = vrot.slane %v2226, 4
    %v2243 = vadd.f32 %v2226, %v2242
    %v2244 = vrot.slane %v2243, 2
    %v2245 = vadd.f32 %v2243, %v2244
    %v2246 = vrot.slane %v2245, 1
    %v2247 = vadd.f32 %v2245, %v2246
    %v2248 = vmul.f32 %v2247, 0.125
    %v2249 = vsub.f32 %v2226, %v2248
    %v2250 = vmul.f32 %v2249, %v2249
    %v2251 = vrot.slane %v2250, 4
    %v2252 = vadd.f32 %v2250, %v2251
    %v2253 = vrot.slane %v2252, 2
    %v2254 = vadd.f32 %v2252, %v2253
    %v2255 = vrot.slane %v2254, 1
    %v2256 = vadd.f32 %v2254, %v2255
    %v2257 = vmul.f32 %v2256, 0.14285715
    %v2258 = vstv %s2229
    %v2259 = vmul.f32 %v2258, %v2235
    %v2260 = vstv %s2230
    %v2261 = vmul.f32 %v2260, %v2248
    %v2262 = vadd.f32 %v2259, %v2261
    %v2263 = vstv %s2231
    %v2264 = vmul.f32 %v2263, %v2241
    %v2265 = vstv %s2232
    %v2266 = vmul.f32 %v2265, %v2257
    %v2267 = vadd.f32 %v2264, %v2266
    %v2268 = vadd.f32 %v2267, 1e-05
    %v2269 = vrsqrt.pop %v2268
    %v2270 = vmul.f32 %v2269, %v2268
    %v2271 = vmul.f32 %v2270, %v2269
    %v2272 = vmul.f32 0.5, %v2271
    %v2273 = vsub.f32 1.5, %v2272
    %v2274 = vmul.f32 %v2269, %v2273
    %vm2275 = vweird.f32 %v2268
    %vm2276 = vweird.f32 %v2269
    %vm2277 = vmor %vm2275, %vm2276
    %v2278 = vsel %vm2277, %v2269, %v2274
    %v2279 = vsub.f32 %v2226, %v2262
    %v2281 = vperm.slane %v2227, 0
    %v2283 = vmul.f32 %v2278, %v2281
    %v2284 = vmul.f32 %v2279, %v2283
    %v2286 = vperm.slane %v2228, 0
    %v2288 = vadd.f32 %v2284, %v2286
    %v2289 = vld [vmem:[#allocation10] sm:$0xff]
    %v2290 = vmul.f32 %v2288, %v2289
    %v2291 = vpack.c.bf16 %v2290, %v2290
    %v2292 = vld [vmem:[#allocation12] sm:$0xf]
    %v2293 = vld [vmem:[#allocation12 + $0x4] sm:$0xf]
    %v2294 = vld [vmem:[#allocation12 + $0x8] sm:$0xf]
    %v2295 = vld [vmem:[#allocation12 + $0xc] sm:$0xf]
    %v2296 = vld [vmem:[#allocation12 + $0x10] sm:$0xf]
    %v2297 = vld [vmem:[#allocation12 + $0x14] sm:$0xf]
    %v2298 = vld [vmem:[#allocation12 + $0x18] sm:$0xf]
    %v2299 = vld [vmem:[#allocation12 + $0x1c] sm:$0xf]
    %v2300 = vld [vmem:[#allocation12 + $0x20] sm:$0xf]
    %v2301 = vld [vmem:[#allocation12 + $0x24] sm:$0xf]
    %v2302 = vld [vmem:[#allocation12 + $0x28] sm:$0xf]
    %v2303 = vld [vmem:[#allocation12 + $0x2c] sm:$0xf]
    %v2304 = vld [vmem:[#allocation12 + $0x30] sm:$0xf]
    %v2305 = vld [vmem:[#allocation12 + $0x34] sm:$0xf]
    %v2306 = vld [vmem:[#allocation12 + $0x38] sm:$0xf]
    %v2307 = vld [vmem:[#allocation12 + $0x3c] sm:$0xf]
    %v2308 = vld [vmem:[#allocation13] sm:$0x1]
    %v2310 = vperm.slane %v2308, 0
    %v2328 = vunpack.c.l.b16 %v2292
    %v2329 = vunpack.c.l.b16 %v2293
    %v2330 = vunpack.c.l.b16 %v2294
    %v2331 = vunpack.c.l.b16 %v2295
    %v2332 = vunpack.c.l.b16 %v2296
    %v2333 = vunpack.c.l.b16 %v2297
    %v2334 = vunpack.c.l.b16 %v2298
    %v2335 = vunpack.c.l.b16 %v2299
    %v2336 = vunpack.c.l.b16 %v2300
    %v2337 = vunpack.c.l.b16 %v2301
    %v2338 = vunpack.c.l.b16 %v2302
    %v2339 = vunpack.c.l.b16 %v2303
    %v2340 = vunpack.c.l.b16 %v2304
    %v2341 = vunpack.c.l.b16 %v2305
    %v2342 = vunpack.c.l.b16 %v2306
    %v2343 = vunpack.c.l.b16 %v2307
    %v2344 = vpack.c.b16 %v2329, %v2328
    %v2345 = vpack.c.b16 %v2331, %v2330
    %v2346 = vpack.c.b16 %v2333, %v2332
    %v2347 = vpack.c.b16 %v2335, %v2334
    %v2348 = vpack.c.b16 %v2337, %v2336
    %v2349 = vpack.c.b16 %v2339, %v2338
    %v2350 = vpack.c.b16 %v2341, %v2340
    %v2351 = vpack.c.b16 %v2343, %v2342
    %2360 = vmatpush.bf16.msra.mxu0 %v2351
    %2361 = vmatpush.bf16.msra.mxu0 %v2350
    %2362 = vmatpush.bf16.msra.mxu0 %v2349
    %2363 = vmatpush.bf16.msra.mxu0 %v2348
    %2364 = vmatpush.bf16.msra.mxu0 %v2347
    %2365 = vmatpush.bf16.msra.mxu0 %v2346
    %2366 = vmatpush.bf16.msra.mxu0 %v2345
    %2367 = vmatpush.bf16.msra.mxu0 %v2344
    %2368 = vmatmul.bf16.gmra.mxu0 %v2291
    %v2369 = vpop.f32.mrf.mxu0
    %v2370 = vadd.f32 %v2310, %v2369
    %v2371 = vpop.f32.mrf.mxu0
    %2372 = vdwg.mxu0
    %vm2373 = vcmp.ge.f32.partialorder %v2370, 0.0
    %v2374 = vmul.f32 %v2370, 0.01
    %v2375 = vsel %vm2373, %v2370, %v2374
    %v2376 = vld [vmem:[#allocation15] sm:$0x1]
    %v2377 = vld [vmem:[#allocation16] sm:$0x1]
    %s2378 = sld [smem:[#allocation2 + $0x4]]
    %s2379 = sld [smem:[#allocation2 + $0x5]]
    %s2380 = sld [smem:[#allocation2 + $0x6]]
    %s2381 = sld [smem:[#allocation2 + $0x7]]
    %2382 = vadd.xlane.f32.xlu0 %v2375
    %v2383 = vpop.xlane.xlu0 %2382
    %v2384 = vmul.f32 %v2383, 0.01
    %v2385 = vsub.f32 %v2375, %v2384
    %v2386 = vmul.f32 %v2385, %v193
    %v2387 = vmul.f32 %v2386, %v2386
    %2388 = vadd.xlane.f32.xlu0 %v2387
    %v2389 = vpop.xlane.xlu0 %2388
    %v2390 = vmul.f32 %v2389, 0.01010101
    %v2391 = vrot.slane %v2375, 4
    %v2392 = vadd.f32 %v2375, %v2391
    %v2393 = vrot.slane %v2392, 2
    %v2394 = vadd.f32 %v2392, %v2393
    %v2395 = vrot.slane %v2394, 1
    %v2396 = vadd.f32 %v2394, %v2395
    %v2397 = vmul.f32 %v2396, 0.125
    %v2398 = vsub.f32 %v2375, %v2397
    %v2399 = vmul.f32 %v2398, %v2398
    %v2400 = vrot.slane %v2399, 4
    %v2401 = vadd.f32 %v2399, %v2400
    %v2402 = vrot.slane %v2401, 2
    %v2403 = vadd.f32 %v2401, %v2402
    %v2404 = vrot.slane %v2403, 1
    %v2405 = vadd.f32 %v2403, %v2404
    %v2406 = vmul.f32 %v2405, 0.14285715
    %v2407 = vstv %s2378
    %v2408 = vmul.f32 %v2407, %v2384
    %v2409 = vstv %s2379
    %v2410 = vmul.f32 %v2409, %v2397
    %v2411 = vadd.f32 %v2408, %v2410
    %v2412 = vstv %s2380
    %v2413 = vmul.f32 %v2412, %v2390
    %v2414 = vstv %s2381
    %v2415 = vmul.f32 %v2414, %v2406
    %v2416 = vadd.f32 %v2413, %v2415
    %v2417 = vadd.f32 %v2416, 1e-05
    %v2418 = vrsqrt.pop %v2417
    %v2419 = vmul.f32 %v2418, %v2417
    %v2420 = vmul.f32 %v2419, %v2418
    %v2421 = vmul.f32 0.5, %v2420
    %v2422 = vsub.f32 1.5, %v2421
    %v2423 = vmul.f32 %v2418, %v2422
    %vm2424 = vweird.f32 %v2417
    %vm2425 = vweird.f32 %v2418
    %vm2426 = vmor %vm2424, %vm2425
    %v2427 = vsel %vm2426, %v2418, %v2423
    %v2428 = vsub.f32 %v2375, %v2411
    %v2430 = vperm.slane %v2376, 0
    %v2432 = vmul.f32 %v2427, %v2430
    %v2433 = vmul.f32 %v2428, %v2432
    %v2435 = vperm.slane %v2377, 0
    %v2437 = vadd.f32 %v2433, %v2435
    %v2438 = vld [vmem:[%s11] sm:$0xff]
    %v2439 = vmul.f32 %v2437, %v2438
    %v2440 = vpack.c.bf16 %v2439, %v2439
    %v2441 = vld [vmem:[#allocation18] sm:$0xf]
    %v2442 = vld [vmem:[#allocation18 + $0x4] sm:$0xf]
    %v2443 = vld [vmem:[#allocation18 + $0x8] sm:$0xf]
    %v2444 = vld [vmem:[#allocation18 + $0xc] sm:$0xf]
    %v2445 = vld [vmem:[#allocation18 + $0x10] sm:$0xf]
    %v2446 = vld [vmem:[#allocation18 + $0x14] sm:$0xf]
    %v2447 = vld [vmem:[#allocation18 + $0x18] sm:$0xf]
    %v2448 = vld [vmem:[#allocation18 + $0x1c] sm:$0xf]
    %v2449 = vld [vmem:[#allocation18 + $0x20] sm:$0xf]
    %v2450 = vld [vmem:[#allocation18 + $0x24] sm:$0xf]
    %v2451 = vld [vmem:[#allocation18 + $0x28] sm:$0xf]
    %v2452 = vld [vmem:[#allocation18 + $0x2c] sm:$0xf]
    %v2453 = vld [vmem:[#allocation18 + $0x30] sm:$0xf]
    %v2454 = vld [vmem:[#allocation18 + $0x34] sm:$0xf]
    %v2455 = vld [vmem:[#allocation18 + $0x38] sm:$0xf]
    %v2456 = vld [vmem:[#allocation18 + $0x3c] sm:$0xf]
    %v2457 = vld [vmem:[%s13] sm:$0x1]
    %v2459 = vperm.slane %v2457, 0
    %v2477 = vunpack.c.l.b16 %v2441
    %v2478 = vunpack.c.l.b16 %v2442
    %v2479 = vunpack.c.l.b16 %v2443
    %v2480 = vunpack.c.l.b16 %v2444
    %v2481 = vunpack.c.l.b16 %v2445
    %v2482 = vunpack.c.l.b16 %v2446
    %v2483 = vunpack.c.l.b16 %v2447
    %v2484 = vunpack.c.l.b16 %v2448
    %v2485 = vunpack.c.l.b16 %v2449
    %v2486 = vunpack.c.l.b16 %v2450
    %v2487 = vunpack.c.l.b16 %v2451
    %v2488 = vunpack.c.l.b16 %v2452
    %v2489 = vunpack.c.l.b16 %v2453
    %v2490 = vunpack.c.l.b16 %v2454
    %v2491 = vunpack.c.l.b16 %v2455
    %v2492 = vunpack.c.l.b16 %v2456
    %v2493 = vpack.c.b16 %v2478, %v2477
    %v2494 = vpack.c.b16 %v2480, %v2479
    %v2495 = vpack.c.b16 %v2482, %v2481
    %v2496 = vpack.c.b16 %v2484, %v2483
    %v2497 = vpack.c.b16 %v2486, %v2485
    %v2498 = vpack.c.b16 %v2488, %v2487
    %v2499 = vpack.c.b16 %v2490, %v2489
    %v2500 = vpack.c.b16 %v2492, %v2491
    %2509 = vmatpush.bf16.msra.mxu0 %v2500
    %2510 = vmatpush.bf16.msra.mxu0 %v2499
    %2511 = vmatpush.bf16.msra.mxu0 %v2498
    %2512 = vmatpush.bf16.msra.mxu0 %v2497
    %2513 = vmatpush.bf16.msra.mxu0 %v2496
    %2514 = vmatpush.bf16.msra.mxu0 %v2495
    %2515 = vmatpush.bf16.msra.mxu0 %v2494
    %2516 = vmatpush.bf16.msra.mxu0 %v2493
    %2517 = vmatmul.bf16.gmra.mxu0 %v2440
    %v2518 = vpop.f32.mrf.mxu0
    %v2519 = vadd.f32 %v2459, %v2518
    %v2520 = vpop.f32.mrf.mxu0
    %2521 = vdwg.mxu0
    %2522 = vst [vmem:[#allocation19] sm:$0xff] %v2519
    // Predicated region
    $region98: #{tpu_custom_call.1} parent=1 // pred_check
      _
    $region99: #{tpu_custom_call.1} parent=1 // pred_check_branch
      %2524 = sbr.rel (0) target = $region101
    $region100: #{tpu_custom_call.1} parent=1 // pred_region
      %2526 = vsyncadd [#allocation4], 0
      %s2528 = sshll.u32 [#allocation19], 4
      %s2529 = int_to_ptr.vmem [resolvable:$true] %s2528
      %s2530 = sshll.u32 %s14, 4
      %s2531 = int_to_ptr.hbm [resolvable:$true] %s2530
      %2533 = dma.vmem_to_hbm [thread:$0]  %s2529, 128, %s2531, [#allocation4]
    $region101: #{tpu_custom_call.1} parent=1 // pred_fallthru
      _
    // Predicated region
    $region102: #{tpu_custom_call.1} parent=1 // pred_check
      _
    $region103: #{tpu_custom_call.1} parent=1 // pred_check_branch
      %2535 = sbr.rel (0) target = $region105
    $region104: #{tpu_custom_call.1} parent=1 // pred_region
      %2537 = dma.done [#allocation4], 128
    $region105: #{tpu_custom_call.1} parent=1 // pred_fallthru
      _
    %2538 = vsyncpa [#allocation3], 1
    %2539 = vsyncpa [#allocation8], 1
    %2540 = vsyncpa [#allocation11], 1
    %2541 = vsyncpa [#allocation14], 1
    %2542 = vsyncpa [#allocation17], 1
    %2543 = vsyncpa [#allocation4], 1
    %2544 = vsyncpa [#allocation5], 1

</llo_original>
